<compile_context>
chip_gen: v7x
topology: tpu7x:2x2x1
jax: 0.10.0
libtpu: 0.0.40
codegen_flags: <defaults>
</compile_context>

<pallas_src>
import functools

import jax
import jax.numpy as jnp
from jax.experimental import pallas as pl
from jax.experimental.pallas import tpu as pltpu


# --------------------------------------------------------------------------
# Constant helpers (built in the wrapper, passed to the kernel as inputs).
# --------------------------------------------------------------------------
def _tap_masks(H, W):
    """(9, H*W) 0/1 masks implementing zero 'same' padding for each 3x3 tap.

    Tap order t = (ky)*3 + (kx) with (dy, dx) = (ky-1, kx-1), matching
    PyTorch's (ky, kx) kernel ordering.
    """
    p = jnp.arange(H * W)
    y = p // W
    x = p % W
    masks = []
    for dy in (-1, 0, 1):
        for dx in (-1, 0, 1):
            valid = ((y + dy >= 0) & (y + dy < H) &
                     (x + dx >= 0) & (x + dx < W))
            masks.append(valid.astype(jnp.float32))
    return jnp.stack(masks)  # (9, H*W)


def _resample_matrices(H, W):
    """Constant selection matrices for stride-2 subsample and nearest 2x up."""
    Ho, Wo = H // 2, W // 2
    p = jnp.arange(H * W)
    y, x = p // W, p % W
    q = jnp.arange(Ho * Wo)
    yo, xo = q // Wo, q % Wo
    # dense-conv output (C, H*W) @ S -> stride-2 subsample ([::2, ::2])
    S = ((y[:, None] == 2 * yo[None, :]) &
         (x[:, None] == 2 * xo[None, :])).astype(jnp.float32)      # (H*W, Ho*Wo)
    # low-res feature (C, Ho*Wo) @ U -> nearest-neighbor 2x upsample
    U = ((yo[:, None] == y[None, :] // 2) &
         (xo[:, None] == x[None, :] // 2)).astype(jnp.float32)     # (Ho*Wo, H*W)
    return S, U


def _weight_slab(w_taps, b):
    """(9, Cout, Cin) taps + (Cout,) bias -> (Cout, 9*Cin + 1) bf16 slab.

    Column t*Cin + ci holds w[co, ci, ky, kx] with t = ky*3 + kx; the last
    column is the bias (consumed by the ones row of the im2col stack).
    To load real PyTorch Conv2d weights w (Cout, Cin, 3, 3):
        w_taps = w.permute(2, 3, 0, 1).reshape(9, Cout, Cin)
    """
    nine, Cout, Cin = w_taps.shape
    slab = jnp.transpose(w_taps, (1, 0, 2)).reshape(Cout, nine * Cin)
    bias = jnp.reshape(b, (Cout, 1))
    return jnp.concatenate([slab, bias], axis=1).astype(jnp.bfloat16)


def _pick_lane_batch(N, max_b=8):
    """Largest divisor B of N with N//B >= 2 (keeps >=2 grid steps), B <= max_b."""
    if N <= 1:
        return 1
    best = 1
    for b in range(1, min(max_b, N) + 1):
        if N % b == 0 and N // b >= 2:
            best = b
    return best


# --------------------------------------------------------------------------
# Fused kernel: one group of B lane-batched images per grid step.
# --------------------------------------------------------------------------
def _conv3x3(x, w_slab_ref, masks, ones_row, W_img, lanes, activation):
    """3x3 'same' conv in (C, lanes) layout as ONE bf16 im2col MXU dot.

    x          : (Cin, lanes) f32 VMEM-resident activation
    w_slab_ref : (Cout, 9*Cin + 1) bf16 ref (bias folded into last column)
    masks      : (9, lanes) f32 value (hoisted load) of 0/1 tap-validity masks
    ones_row   : (1, lanes) f32 value (hoisted) feeding the bias column
    """
    rows = []
    t = 0
    for dy in (-1, 0, 1):
        for dx in (-1, 0, 1):
            d = dy * W_img + dx
            if d == 0:
                rows.append(x)  # center tap: no shift, mask is all-ones
            else:
                # shifted[p] = x[p + d]; wrap / cross-image bleed zeroed by mask
                shifted = pltpu.roll(x, shift=(-d) % lanes, axis=1)
                rows.append(shifted * masks[t:t + 1, :])
            t += 1
    rows.append(ones_row)                                       # bias row
    stack = jnp.concatenate(rows, axis=0).astype(jnp.bfloat16)  # (9*Cin+1, lanes)
    acc = jnp.dot(w_slab_ref[...], stack,
                  preferred_element_type=jnp.float32)           # (Cout, lanes) f32
    if activation == "relu":
        return jnp.maximum(acc, 0.0)
    if activation == "tanh":
        return jnp.tanh(acc)
    return acc


def _hourglass_kernel(x_ref,
                      w_pre, w_dn, w_mid, w_up, w_post,
                      m16_ref, m8_ref, s_ref, u_ref,
                      o_ref, *, H, W, B):
    HW = H * W
    Wo = W // 2
    lanes_hi = B * HW
    lanes_lo = B * (H // 2) * Wo

    x = x_ref[0]                            # (Cin, lanes_hi) f32
    m16 = m16_ref[...]                      # (9, lanes_hi)   hoisted mask load
    m8 = m8_ref[...]                        # (9, lanes_lo)
    ones_hi = jnp.ones((1, lanes_hi), jnp.float32)
    ones_lo = jnp.ones((1, lanes_lo), jnp.float32)

    # encoder
    h0 = _conv3x3(x, w_pre, m16, ones_hi, W, lanes_hi, "relu")    # (c1, lanes_hi)
    dn = _conv3x3(h0, w_dn, m16, ones_hi, W, lanes_hi, "relu")    # (c2, lanes_hi)
    # stride-2 downsample (== Conv2d(stride=2, padding=1) of the same weights)
    d = jnp.dot(dn.astype(jnp.bfloat16), s_ref[...],
                preferred_element_type=jnp.float32)               # (c2, lanes_lo)

    # bottleneck
    m = _conv3x3(d, w_mid, m8, ones_lo, Wo, lanes_lo, "relu")     # (c2, lanes_lo)

    # decoder: nearest 2x upsample + conv
    up = jnp.dot(m.astype(jnp.bfloat16), u_ref[...],
                 preferred_element_type=jnp.float32)              # (c2, lanes_hi)
    u = _conv3x3(up, w_up, m16, ones_hi, W, lanes_hi, "relu")     # (c1, lanes_hi)

    # residual skip + 1-channel head with fused tanh (EncodeNet_noise.forward)
    r = h0 + u                                                    # (c1, lanes_hi)
    y = _conv3x3(r, w_post, m16, ones_hi, W, lanes_hi, "tanh")    # (1, lanes_hi)

    o_ref[0] = y


# --------------------------------------------------------------------------
# Wrapper
# --------------------------------------------------------------------------
@functools.partial(jax.jit, static_argnames=("max_lane_batch",))
def encode_net_noise(x_nchw, params, max_lane_batch=8):
    N, Cin, H, W = x_nchw.shape
    assert H % 2 == 0 and W % 2 == 0
    HW = H * W

    B = _pick_lane_batch(N, max_lane_batch)   # images per grid step (in lanes)
    Nb = N // B
    lanes_hi = B * HW

    # NCHW flattens contiguously to (N, C, H*W); lane-batch B images per step.
    x = x_nchw.astype(jnp.float32).reshape(N, Cin, HW)
    if B > 1:
        x = (x.reshape(Nb, B, Cin, HW)
               .transpose(0, 2, 1, 3)
               .reshape(Nb, Cin, lanes_hi))
    else:
        x = x.reshape(Nb, Cin, lanes_hi)

    # Per-image masks replicated along lanes (they zero all cross-image taps).
    m16 = jnp.tile(_tap_masks(H, W), (1, B))                 # (9, B*HW)      f32
    m8 = jnp.tile(_tap_masks(H // 2, W // 2), (1, B))        # (9, B*HW/4)    f32
    # Block-diagonal resample matrices (one block per lane-batched image).
    S, U = _resample_matrices(H, W)
    if B > 1:
        eye = jnp.eye(B, dtype=jnp.float32)
        S = jnp.kron(eye, S)
        U = jnp.kron(eye, U)
    S = S.astype(jnp.bfloat16)                               # (B*HW, B*HW/4)
    U = U.astype(jnp.bfloat16)                               # (B*HW/4, B*HW)
    # TODO(synk): dense S/U scale as (H*W)^2/4 -- replace with a layout-aware
    # selection (or fold into the down conv) before using >=64x64 on v7x.

    # Conv weights: (Cout, 9*Cin+1) bf16 slabs with bias folded in.
    w_pre = _weight_slab(*params["pre"])
    w_dn = _weight_slab(*params["down"])
    w_mid = _weight_slab(*params["mid"])
    w_up = _weight_slab(*params["up"])
    w_post = _weight_slab(*params["post"])

    consts = (w_pre, w_dn, w_mid, w_up, w_post, m16, m8, S, U)

    kernel = functools.partial(_hourglass_kernel, H=H, W=W, B=B)

    out = pl.pallas_call(
        kernel,
        out_shape=jax.ShapeDtypeStruct((Nb, 1, lanes_hi), jnp.float32),
        grid=(Nb,),
        in_specs=[pl.BlockSpec((1, Cin, lanes_hi), lambda n: (n, 0, 0))]
                 # constants: full-array blocks with constant index maps
                 # (fetched once, resident across grid steps)
                 + [pl.BlockSpec(c.shape, lambda n: (0, 0)) for c in consts],
        out_specs=pl.BlockSpec((1, 1, lanes_hi), lambda n: (n, 0, 0)),
        compiler_params=pltpu.CompilerParams(
            dimension_semantics=("parallel",)),
    )(x, *consts)

    # lane-dense (Nb, 1, B*HW) -> NCHW (N, 1, H, W)
    if B > 1:
        out = (out.reshape(Nb, 1, B, HW)
                  .transpose(0, 2, 1, 3)
                  .reshape(N, 1, H, W))
    else:
        out = out.reshape(N, 1, H, W)
    return out


# --------------------------------------------------------------------------
# Parameter construction (deterministic, in-script).
# Stored as (9, Cout, Cin) taps + (Cout,) bias; _weight_slab packs them.
# --------------------------------------------------------------------------
def init_params(in_channel=4, out_channel=1, c1=8, c2=16, seed=42):
    key = jax.random.PRNGKey(seed)

    def conv_init(k, kin, kout):
        kw, kb = jax.random.split(k)
        fan_in = 9 * kin
        w = jax.random.normal(kw, (9, kout, kin), jnp.float32) * jnp.sqrt(
            2.0 / fan_in)
        b = 0.01 * jax.random.normal(kb, (kout,), jnp.float32)
        return w, b

    keys = jax.random.split(key, 5)
    return {
        "pre": conv_init(keys[0], in_channel, c1),
        "down": conv_init(keys[1], c1, c2),
        "mid": conv_init(keys[2], c2, c2),
        "up": conv_init(keys[3], c2, c1),
        "post": conv_init(keys[4], c1, out_channel),
    }


if __name__ == "__main__":
    N, C, H, W = 2, 4, 16, 16
    x = jax.random.normal(jax.random.PRNGKey(0), (N, C, H, W), jnp.float32)

    params = init_params(in_channel=C, out_channel=1)

    y = encode_net_noise(x, params)
    y = jax.block_until_ready(y)

    assert y.shape == (N, 1, H, W), y.shape
    assert bool(jnp.all(jnp.abs(y) <= 1.0)), "tanh output out of range"
    assert bool(jnp.all(jnp.isfinite(y))), "non-finite output"
    print("KERNEL_OK")
</pallas_src>

<mosaic_0001>
module attributes {stable_mosaic.version = 11 : i64} {
  func.func @_hourglass_kernel(%arg0: i32, %arg1: memref<1x4x256xf32, #tpu.memory_space<vmem>>, %arg2: memref<8x37xbf16, #tpu.memory_space<vmem>>, %arg3: memref<16x73xbf16, #tpu.memory_space<vmem>>, %arg4: memref<16x145xbf16, #tpu.memory_space<vmem>>, %arg5: memref<8x145xbf16, #tpu.memory_space<vmem>>, %arg6: memref<1x73xbf16, #tpu.memory_space<vmem>>, %arg7: memref<9x256xf32, #tpu.memory_space<vmem>>, %arg8: memref<9x64xf32, #tpu.memory_space<vmem>>, %arg9: memref<256x64xbf16, #tpu.memory_space<vmem>>, %arg10: memref<64x256xbf16, #tpu.memory_space<vmem>>, %arg11: memref<1x1x256xf32, #tpu.memory_space<vmem>>) attributes {dimension_semantics = [#tpu.dimension_semantics<parallel>], iteration_bounds = array<i64: 2>, scalar_prefetch = 0 : i64, scratch_operands = 0 : i64, tpu.core_type = #tpu.core_type<tc>, window_params = [{transform_indices = @transform_0, window_bounds = array<i64: 1, 4, 256>}, {pipeline_mode = #tpu.pipeline_mode<synchronous>, transform_indices = @transform_1, window_bounds = array<i64: 8, 37>}, {pipeline_mode = #tpu.pipeline_mode<synchronous>, transform_indices = @transform_2, window_bounds = array<i64: 16, 73>}, {pipeline_mode = #tpu.pipeline_mode<synchronous>, transform_indices = @transform_3, window_bounds = array<i64: 16, 145>}, {pipeline_mode = #tpu.pipeline_mode<synchronous>, transform_indices = @transform_4, window_bounds = array<i64: 8, 145>}, {pipeline_mode = #tpu.pipeline_mode<synchronous>, transform_indices = @transform_5, window_bounds = array<i64: 1, 73>}, {pipeline_mode = #tpu.pipeline_mode<synchronous>, transform_indices = @transform_6, window_bounds = array<i64: 9, 256>}, {pipeline_mode = #tpu.pipeline_mode<synchronous>, transform_indices = @transform_7, window_bounds = array<i64: 9, 64>}, {pipeline_mode = #tpu.pipeline_mode<synchronous>, transform_indices = @transform_8, window_bounds = array<i64: 256, 64>}, {pipeline_mode = #tpu.pipeline_mode<synchronous>, transform_indices = @transform_9, window_bounds = array<i64: 64, 256>}, {transform_indices = @transform_10, window_bounds = array<i64: 1, 1, 256>}]} {
    %c0 = arith.constant 0 : index
    %c0_0 = arith.constant 0 : index
    %c0_1 = arith.constant 0 : index
    %0 = vector.load %arg1[%c0, %c0_0, %c0_1] : memref<1x4x256xf32, #tpu.memory_space<vmem>>, vector<1x4x256xf32>
    %1 = vector.shape_cast %0 : vector<1x4x256xf32> to vector<4x256xf32>
    %c0_2 = arith.constant 0 : index
    %c0_3 = arith.constant 0 : index
    %2 = vector.load %arg7[%c0_2, %c0_3] : memref<9x256xf32, #tpu.memory_space<vmem>>, vector<9x256xf32>
    %c0_4 = arith.constant 0 : index
    %c0_5 = arith.constant 0 : index
    %3 = vector.load %arg8[%c0_4, %c0_5] : memref<9x64xf32, #tpu.memory_space<vmem>>, vector<9x64xf32>
    %cst = arith.constant 1.000000e+00 : f32
    %4 = vector.broadcast %cst : f32 to vector<1x256xf32>
    %cst_6 = arith.constant 1.000000e+00 : f32
    %5 = vector.broadcast %cst_6 : f32 to vector<1x64xf32>
    %c17_i32 = arith.constant 17 : i32
    %6 = tpu.dynamic_rotate %1 by %c17_i32 dim 1 : vector<4x256xf32>, i32 -> vector<4x256xf32>
    %7 = vector.extract_strided_slice %2 {offsets = [0, 0], sizes = [1, 256], strides = [1, 1]} : vector<9x256xf32> to vector<1x256xf32>
    %8 = vector.broadcast %7 : vector<1x256xf32> to vector<4x256xf32>
    %9 = arith.mulf %6, %8 : vector<4x256xf32>
    %c16_i32 = arith.constant 16 : i32
    %10 = tpu.dynamic_rotate %1 by %c16_i32 dim 1 : vector<4x256xf32>, i32 -> vector<4x256xf32>
    %11 = vector.extract_strided_slice %2 {offsets = [1, 0], sizes = [1, 256], strides = [1, 1]} : vector<9x256xf32> to vector<1x256xf32>
    %12 = vector.broadcast %11 : vector<1x256xf32> to vector<4x256xf32>
    %13 = arith.mulf %10, %12 : vector<4x256xf32>
    %c15_i32 = arith.constant 15 : i32
    %14 = tpu.dynamic_rotate %1 by %c15_i32 dim 1 : vector<4x256xf32>, i32 -> vector<4x256xf32>
    %15 = vector.extract_strided_slice %2 {offsets = [2, 0], sizes = [1, 256], strides = [1, 1]} : vector<9x256xf32> to vector<1x256xf32>
    %16 = vector.broadcast %15 : vector<1x256xf32> to vector<4x256xf32>
    %17 = arith.mulf %14, %16 : vector<4x256xf32>
    %c1_i32 = arith.constant 1 : i32
    %18 = tpu.dynamic_rotate %1 by %c1_i32 dim 1 : vector<4x256xf32>, i32 -> vector<4x256xf32>
    %19 = vector.extract_strided_slice %2 {offsets = [3, 0], sizes = [1, 256], strides = [1, 1]} : vector<9x256xf32> to vector<1x256xf32>
    %20 = vector.broadcast %19 : vector<1x256xf32> to vector<4x256xf32>
    %21 = arith.mulf %18, %20 : vector<4x256xf32>
    %c255_i32 = arith.constant 255 : i32
    %22 = tpu.dynamic_rotate %1 by %c255_i32 dim 1 : vector<4x256xf32>, i32 -> vector<4x256xf32>
    %23 = vector.extract_strided_slice %2 {offsets = [5, 0], sizes = [1, 256], strides = [1, 1]} : vector<9x256xf32> to vector<1x256xf32>
    %24 = vector.broadcast %23 : vector<1x256xf32> to vector<4x256xf32>
    %25 = arith.mulf %22, %24 : vector<4x256xf32>
    %c241_i32 = arith.constant 241 : i32
    %26 = tpu.dynamic_rotate %1 by %c241_i32 dim 1 : vector<4x256xf32>, i32 -> vector<4x256xf32>
    %27 = vector.extract_strided_slice %2 {offsets = [6, 0], sizes = [1, 256], strides = [1, 1]} : vector<9x256xf32> to vector<1x256xf32>
    %28 = vector.broadcast %27 : vector<1x256xf32> to vector<4x256xf32>
    %29 = arith.mulf %26, %28 : vector<4x256xf32>
    %c240_i32 = arith.constant 240 : i32
    %30 = tpu.dynamic_rotate %1 by %c240_i32 dim 1 : vector<4x256xf32>, i32 -> vector<4x256xf32>
    %31 = vector.extract_strided_slice %2 {offsets = [7, 0], sizes = [1, 256], strides = [1, 1]} : vector<9x256xf32> to vector<1x256xf32>
    %32 = vector.broadcast %31 : vector<1x256xf32> to vector<4x256xf32>
    %33 = arith.mulf %30, %32 : vector<4x256xf32>
    %c239_i32 = arith.constant 239 : i32
    %34 = tpu.dynamic_rotate %1 by %c239_i32 dim 1 : vector<4x256xf32>, i32 -> vector<4x256xf32>
    %35 = vector.extract_strided_slice %2 {offsets = [8, 0], sizes = [1, 256], strides = [1, 1]} : vector<9x256xf32> to vector<1x256xf32>
    %36 = vector.broadcast %35 : vector<1x256xf32> to vector<4x256xf32>
    %37 = arith.mulf %34, %36 : vector<4x256xf32>
    %38 = tpu.concatenate %9, %13, %17, %21, %1, %25, %29, %33, %37, %4 in 0 : vector<4x256xf32>, vector<4x256xf32>, vector<4x256xf32>, vector<4x256xf32>, vector<4x256xf32>, vector<4x256xf32>, vector<4x256xf32>, vector<4x256xf32>, vector<4x256xf32>, vector<1x256xf32> -> vector<37x256xf32>
    %39 = arith.truncf %38 : vector<37x256xf32> to vector<37x256xbf16>
    %c0_7 = arith.constant 0 : index
    %c0_8 = arith.constant 0 : index
    %40 = vector.load %arg2[%c0_7, %c0_8] : memref<8x37xbf16, #tpu.memory_space<vmem>>, vector<8x37xbf16>
    %cst_9 = arith.constant dense<0.000000e+00> : vector<8x256xf32>
    %41 = tpu.matmul %40, %39, %cst_9 {dimension_numbers = #tpu.dot_dimension_numbers<[1], [0], [0], [1], [0, 0, 1, 1], [], []>} : vector<8x37xbf16>, vector<37x256xbf16>, vector<8x256xf32> -> vector<8x256xf32>
    %cst_10 = arith.constant 0.000000e+00 : f32
    %42 = vector.broadcast %cst_10 : f32 to vector<8x256xf32>
    %43 = arith.maximumf %41, %42 : vector<8x256xf32>
    %c17_i32_11 = arith.constant 17 : i32
    %44 = tpu.dynamic_rotate %43 by %c17_i32_11 dim 1 : vector<8x256xf32>, i32 -> vector<8x256xf32>
    %45 = vector.extract_strided_slice %2 {offsets = [0, 0], sizes = [1, 256], strides = [1, 1]} : vector<9x256xf32> to vector<1x256xf32>
    %46 = vector.broadcast %45 : vector<1x256xf32> to vector<8x256xf32>
    %47 = arith.mulf %44, %46 : vector<8x256xf32>
    %c16_i32_12 = arith.constant 16 : i32
    %48 = tpu.dynamic_rotate %43 by %c16_i32_12 dim 1 : vector<8x256xf32>, i32 -> vector<8x256xf32>
    %49 = vector.extract_strided_slice %2 {offsets = [1, 0], sizes = [1, 256], strides = [1, 1]} : vector<9x256xf32> to vector<1x256xf32>
    %50 = vector.broadcast %49 : vector<1x256xf32> to vector<8x256xf32>
    %51 = arith.mulf %48, %50 : vector<8x256xf32>
    %c15_i32_13 = arith.constant 15 : i32
    %52 = tpu.dynamic_rotate %43 by %c15_i32_13 dim 1 : vector<8x256xf32>, i32 -> vector<8x256xf32>
    %53 = vector.extract_strided_slice %2 {offsets = [2, 0], sizes = [1, 256], strides = [1, 1]} : vector<9x256xf32> to vector<1x256xf32>
    %54 = vector.broadcast %53 : vector<1x256xf32> to vector<8x256xf32>
    %55 = arith.mulf %52, %54 : vector<8x256xf32>
    %c1_i32_14 = arith.constant 1 : i32
    %56 = tpu.dynamic_rotate %43 by %c1_i32_14 dim 1 : vector<8x256xf32>, i32 -> vector<8x256xf32>
    %57 = vector.extract_strided_slice %2 {offsets = [3, 0], sizes = [1, 256], strides = [1, 1]} : vector<9x256xf32> to vector<1x256xf32>
    %58 = vector.broadcast %57 : vector<1x256xf32> to vector<8x256xf32>
    %59 = arith.mulf %56, %58 : vector<8x256xf32>
    %c255_i32_15 = arith.constant 255 : i32
    %60 = tpu.dynamic_rotate %43 by %c255_i32_15 dim 1 : vector<8x256xf32>, i32 -> vector<8x256xf32>
    %61 = vector.extract_strided_slice %2 {offsets = [5, 0], sizes = [1, 256], strides = [1, 1]} : vector<9x256xf32> to vector<1x256xf32>
    %62 = vector.broadcast %61 : vector<1x256xf32> to vector<8x256xf32>
    %63 = arith.mulf %60, %62 : vector<8x256xf32>
    %c241_i32_16 = arith.constant 241 : i32
    %64 = tpu.dynamic_rotate %43 by %c241_i32_16 dim 1 : vector<8x256xf32>, i32 -> vector<8x256xf32>
    %65 = vector.extract_strided_slice %2 {offsets = [6, 0], sizes = [1, 256], strides = [1, 1]} : vector<9x256xf32> to vector<1x256xf32>
    %66 = vector.broadcast %65 : vector<1x256xf32> to vector<8x256xf32>
    %67 = arith.mulf %64, %66 : vector<8x256xf32>
    %c240_i32_17 = arith.constant 240 : i32
    %68 = tpu.dynamic_rotate %43 by %c240_i32_17 dim 1 : vector<8x256xf32>, i32 -> vector<8x256xf32>
    %69 = vector.extract_strided_slice %2 {offsets = [7, 0], sizes = [1, 256], strides = [1, 1]} : vector<9x256xf32> to vector<1x256xf32>
    %70 = vector.broadcast %69 : vector<1x256xf32> to vector<8x256xf32>
    %71 = arith.mulf %68, %70 : vector<8x256xf32>
    %c239_i32_18 = arith.constant 239 : i32
    %72 = tpu.dynamic_rotate %43 by %c239_i32_18 dim 1 : vector<8x256xf32>, i32 -> vector<8x256xf32>
    %73 = vector.extract_strided_slice %2 {offsets = [8, 0], sizes = [1, 256], strides = [1, 1]} : vector<9x256xf32> to vector<1x256xf32>
    %74 = vector.broadcast %73 : vector<1x256xf32> to vector<8x256xf32>
    %75 = arith.mulf %72, %74 : vector<8x256xf32>
    %76 = tpu.concatenate %47, %51, %55, %59, %43, %63, %67, %71, %75, %4 in 0 : vector<8x256xf32>, vector<8x256xf32>, vector<8x256xf32>, vector<8x256xf32>, vector<8x256xf32>, vector<8x256xf32>, vector<8x256xf32>, vector<8x256xf32>, vector<8x256xf32>, vector<1x256xf32> -> vector<73x256xf32>
    %77 = arith.truncf %76 : vector<73x256xf32> to vector<73x256xbf16>
    %c0_19 = arith.constant 0 : index
    %c0_20 = arith.constant 0 : index
    %78 = vector.load %arg3[%c0_19, %c0_20] : memref<16x73xbf16, #tpu.memory_space<vmem>>, vector<16x73xbf16>
    %cst_21 = arith.constant dense<0.000000e+00> : vector<16x256xf32>
    %79 = tpu.matmul %78, %77, %cst_21 {dimension_numbers = #tpu.dot_dimension_numbers<[1], [0], [0], [1], [0, 0, 1, 1], [], []>} : vector<16x73xbf16>, vector<73x256xbf16>, vector<16x256xf32> -> vector<16x256xf32>
    %cst_22 = arith.constant 0.000000e+00 : f32
    %80 = vector.broadcast %cst_22 : f32 to vector<16x256xf32>
    %81 = arith.maximumf %79, %80 : vector<16x256xf32>
    %82 = arith.truncf %81 : vector<16x256xf32> to vector<16x256xbf16>
    %c0_23 = arith.constant 0 : index
    %c0_24 = arith.constant 0 : index
    %83 = vector.load %arg9[%c0_23, %c0_24] : memref<256x64xbf16, #tpu.memory_space<vmem>>, vector<256x64xbf16>
    %cst_25 = arith.constant dense<0.000000e+00> : vector<16x64xf32>
    %84 = tpu.matmul %82, %83, %cst_25 {dimension_numbers = #tpu.dot_dimension_numbers<[1], [0], [0], [1], [0, 0, 1, 1], [], []>} : vector<16x256xbf16>, vector<256x64xbf16>, vector<16x64xf32> -> vector<16x64xf32>
    %c9_i32 = arith.constant 9 : i32
    %85 = tpu.dynamic_rotate %84 by %c9_i32 dim 1 : vector<16x64xf32>, i32 -> vector<16x64xf32>
    %86 = vector.extract_strided_slice %3 {offsets = [0, 0], sizes = [1, 64], strides = [1, 1]} : vector<9x64xf32> to vector<1x64xf32>
    %87 = vector.broadcast %86 : vector<1x64xf32> to vector<16x64xf32>
    %88 = arith.mulf %85, %87 : vector<16x64xf32>
    %c8_i32 = arith.constant 8 : i32
    %89 = tpu.dynamic_rotate %84 by %c8_i32 dim 1 : vector<16x64xf32>, i32 -> vector<16x64xf32>
    %90 = vector.extract_strided_slice %3 {offsets = [1, 0], sizes = [1, 64], strides = [1, 1]} : vector<9x64xf32> to vector<1x64xf32>
    %91 = vector.broadcast %90 : vector<1x64xf32> to vector<16x64xf32>
    %92 = arith.mulf %89, %91 : vector<16x64xf32>
    %c7_i32 = arith.constant 7 : i32
    %93 = tpu.dynamic_rotate %84 by %c7_i32 dim 1 : vector<16x64xf32>, i32 -> vector<16x64xf32>
    %94 = vector.extract_strided_slice %3 {offsets = [2, 0], sizes = [1, 64], strides = [1, 1]} : vector<9x64xf32> to vector<1x64xf32>
    %95 = vector.broadcast %94 : vector<1x64xf32> to vector<16x64xf32>
    %96 = arith.mulf %93, %95 : vector<16x64xf32>
    %c1_i32_26 = arith.constant 1 : i32
    %97 = tpu.dynamic_rotate %84 by %c1_i32_26 dim 1 : vector<16x64xf32>, i32 -> vector<16x64xf32>
    %98 = vector.extract_strided_slice %3 {offsets = [3, 0], sizes = [1, 64], strides = [1, 1]} : vector<9x64xf32> to vector<1x64xf32>
    %99 = vector.broadcast %98 : vector<1x64xf32> to vector<16x64xf32>
    %100 = arith.mulf %97, %99 : vector<16x64xf32>
    %c63_i32 = arith.constant 63 : i32
    %101 = tpu.dynamic_rotate %84 by %c63_i32 dim 1 : vector<16x64xf32>, i32 -> vector<16x64xf32>
    %102 = vector.extract_strided_slice %3 {offsets = [5, 0], sizes = [1, 64], strides = [1, 1]} : vector<9x64xf32> to vector<1x64xf32>
    %103 = vector.broadcast %102 : vector<1x64xf32> to vector<16x64xf32>
    %104 = arith.mulf %101, %103 : vector<16x64xf32>
    %c57_i32 = arith.constant 57 : i32
    %105 = tpu.dynamic_rotate %84 by %c57_i32 dim 1 : vector<16x64xf32>, i32 -> vector<16x64xf32>
    %106 = vector.extract_strided_slice %3 {offsets = [6, 0], sizes = [1, 64], strides = [1, 1]} : vector<9x64xf32> to vector<1x64xf32>
    %107 = vector.broadcast %106 : vector<1x64xf32> to vector<16x64xf32>
    %108 = arith.mulf %105, %107 : vector<16x64xf32>
    %c56_i32 = arith.constant 56 : i32
    %109 = tpu.dynamic_rotate %84 by %c56_i32 dim 1 : vector<16x64xf32>, i32 -> vector<16x64xf32>
    %110 = vector.extract_strided_slice %3 {offsets = [7, 0], sizes = [1, 64], strides = [1, 1]} : vector<9x64xf32> to vector<1x64xf32>
    %111 = vector.broadcast %110 : vector<1x64xf32> to vector<16x64xf32>
    %112 = arith.mulf %109, %111 : vector<16x64xf32>
    %c55_i32 = arith.constant 55 : i32
    %113 = tpu.dynamic_rotate %84 by %c55_i32 dim 1 : vector<16x64xf32>, i32 -> vector<16x64xf32>
    %114 = vector.extract_strided_slice %3 {offsets = [8, 0], sizes = [1, 64], strides = [1, 1]} : vector<9x64xf32> to vector<1x64xf32>
    %115 = vector.broadcast %114 : vector<1x64xf32> to vector<16x64xf32>
    %116 = arith.mulf %113, %115 : vector<16x64xf32>
    %117 = tpu.concatenate %88, %92, %96, %100, %84, %104, %108, %112, %116, %5 in 0 : vector<16x64xf32>, vector<16x64xf32>, vector<16x64xf32>, vector<16x64xf32>, vector<16x64xf32>, vector<16x64xf32>, vector<16x64xf32>, vector<16x64xf32>, vector<16x64xf32>, vector<1x64xf32> -> vector<145x64xf32>
    %118 = arith.truncf %117 : vector<145x64xf32> to vector<145x64xbf16>
    %c0_27 = arith.constant 0 : index
    %c0_28 = arith.constant 0 : index
    %119 = vector.load %arg4[%c0_27, %c0_28] : memref<16x145xbf16, #tpu.memory_space<vmem>>, vector<16x145xbf16>
    %cst_29 = arith.constant dense<0.000000e+00> : vector<16x64xf32>
    %120 = tpu.matmul %119, %118, %cst_29 {dimension_numbers = #tpu.dot_dimension_numbers<[1], [0], [0], [1], [0, 0, 1, 1], [], []>} : vector<16x145xbf16>, vector<145x64xbf16>, vector<16x64xf32> -> vector<16x64xf32>
    %cst_30 = arith.constant 0.000000e+00 : f32
    %121 = vector.broadcast %cst_30 : f32 to vector<16x64xf32>
    %122 = arith.maximumf %120, %121 : vector<16x64xf32>
    %123 = arith.truncf %122 : vector<16x64xf32> to vector<16x64xbf16>
    %c0_31 = arith.constant 0 : index
    %c0_32 = arith.constant 0 : index
    %124 = vector.load %arg10[%c0_31, %c0_32] : memref<64x256xbf16, #tpu.memory_space<vmem>>, vector<64x256xbf16>
    %cst_33 = arith.constant dense<0.000000e+00> : vector<16x256xf32>
    %125 = tpu.matmul %123, %124, %cst_33 {dimension_numbers = #tpu.dot_dimension_numbers<[1], [0], [0], [1], [0, 0, 1, 1], [], []>} : vector<16x64xbf16>, vector<64x256xbf16>, vector<16x256xf32> -> vector<16x256xf32>
    %c17_i32_34 = arith.constant 17 : i32
    %126 = tpu.dynamic_rotate %125 by %c17_i32_34 dim 1 : vector<16x256xf32>, i32 -> vector<16x256xf32>
    %127 = vector.extract_strided_slice %2 {offsets = [0, 0], sizes = [1, 256], strides = [1, 1]} : vector<9x256xf32> to vector<1x256xf32>
    %128 = vector.broadcast %127 : vector<1x256xf32> to vector<16x256xf32>
    %129 = arith.mulf %126, %128 : vector<16x256xf32>
    %c16_i32_35 = arith.constant 16 : i32
    %130 = tpu.dynamic_rotate %125 by %c16_i32_35 dim 1 : vector<16x256xf32>, i32 -> vector<16x256xf32>
    %131 = vector.extract_strided_slice %2 {offsets = [1, 0], sizes = [1, 256], strides = [1, 1]} : vector<9x256xf32> to vector<1x256xf32>
    %132 = vector.broadcast %131 : vector<1x256xf32> to vector<16x256xf32>
    %133 = arith.mulf %130, %132 : vector<16x256xf32>
    %c15_i32_36 = arith.constant 15 : i32
    %134 = tpu.dynamic_rotate %125 by %c15_i32_36 dim 1 : vector<16x256xf32>, i32 -> vector<16x256xf32>
    %135 = vector.extract_strided_slice %2 {offsets = [2, 0], sizes = [1, 256], strides = [1, 1]} : vector<9x256xf32> to vector<1x256xf32>
    %136 = vector.broadcast %135 : vector<1x256xf32> to vector<16x256xf32>
    %137 = arith.mulf %134, %136 : vector<16x256xf32>
    %c1_i32_37 = arith.constant 1 : i32
    %138 = tpu.dynamic_rotate %125 by %c1_i32_37 dim 1 : vector<16x256xf32>, i32 -> vector<16x256xf32>
    %139 = vector.extract_strided_slice %2 {offsets = [3, 0], sizes = [1, 256], strides = [1, 1]} : vector<9x256xf32> to vector<1x256xf32>
    %140 = vector.broadcast %139 : vector<1x256xf32> to vector<16x256xf32>
    %141 = arith.mulf %138, %140 : vector<16x256xf32>
    %c255_i32_38 = arith.constant 255 : i32
    %142 = tpu.dynamic_rotate %125 by %c255_i32_38 dim 1 : vector<16x256xf32>, i32 -> vector<16x256xf32>
    %143 = vector.extract_strided_slice %2 {offsets = [5, 0], sizes = [1, 256], strides = [1, 1]} : vector<9x256xf32> to vector<1x256xf32>
    %144 = vector.broadcast %143 : vector<1x256xf32> to vector<16x256xf32>
    %145 = arith.mulf %142, %144 : vector<16x256xf32>
    %c241_i32_39 = arith.constant 241 : i32
    %146 = tpu.dynamic_rotate %125 by %c241_i32_39 dim 1 : vector<16x256xf32>, i32 -> vector<16x256xf32>
    %147 = vector.extract_strided_slice %2 {offsets = [6, 0], sizes = [1, 256], strides = [1, 1]} : vector<9x256xf32> to vector<1x256xf32>
    %148 = vector.broadcast %147 : vector<1x256xf32> to vector<16x256xf32>
    %149 = arith.mulf %146, %148 : vector<16x256xf32>
    %c240_i32_40 = arith.constant 240 : i32
    %150 = tpu.dynamic_rotate %125 by %c240_i32_40 dim 1 : vector<16x256xf32>, i32 -> vector<16x256xf32>
    %151 = vector.extract_strided_slice %2 {offsets = [7, 0], sizes = [1, 256], strides = [1, 1]} : vector<9x256xf32> to vector<1x256xf32>
    %152 = vector.broadcast %151 : vector<1x256xf32> to vector<16x256xf32>
    %153 = arith.mulf %150, %152 : vector<16x256xf32>
    %c239_i32_41 = arith.constant 239 : i32
    %154 = tpu.dynamic_rotate %125 by %c239_i32_41 dim 1 : vector<16x256xf32>, i32 -> vector<16x256xf32>
    %155 = vector.extract_strided_slice %2 {offsets = [8, 0], sizes = [1, 256], strides = [1, 1]} : vector<9x256xf32> to vector<1x256xf32>
    %156 = vector.broadcast %155 : vector<1x256xf32> to vector<16x256xf32>
    %157 = arith.mulf %154, %156 : vector<16x256xf32>
    %158 = tpu.concatenate %129, %133, %137, %141, %125, %145, %149, %153, %157, %4 in 0 : vector<16x256xf32>, vector<16x256xf32>, vector<16x256xf32>, vector<16x256xf32>, vector<16x256xf32>, vector<16x256xf32>, vector<16x256xf32>, vector<16x256xf32>, vector<16x256xf32>, vector<1x256xf32> -> vector<145x256xf32>
    %159 = arith.truncf %158 : vector<145x256xf32> to vector<145x256xbf16>
    %c0_42 = arith.constant 0 : index
    %c0_43 = arith.constant 0 : index
    %160 = vector.load %arg5[%c0_42, %c0_43] : memref<8x145xbf16, #tpu.memory_space<vmem>>, vector<8x145xbf16>
    %cst_44 = arith.constant dense<0.000000e+00> : vector<8x256xf32>
    %161 = tpu.matmul %160, %159, %cst_44 {dimension_numbers = #tpu.dot_dimension_numbers<[1], [0], [0], [1], [0, 0, 1, 1], [], []>} : vector<8x145xbf16>, vector<145x256xbf16>, vector<8x256xf32> -> vector<8x256xf32>
    %cst_45 = arith.constant 0.000000e+00 : f32
    %162 = vector.broadcast %cst_45 : f32 to vector<8x256xf32>
    %163 = arith.maximumf %161, %162 : vector<8x256xf32>
    %164 = arith.addf %43, %163 : vector<8x256xf32>
    %c17_i32_46 = arith.constant 17 : i32
    %165 = tpu.dynamic_rotate %164 by %c17_i32_46 dim 1 : vector<8x256xf32>, i32 -> vector<8x256xf32>
    %166 = vector.extract_strided_slice %2 {offsets = [0, 0], sizes = [1, 256], strides = [1, 1]} : vector<9x256xf32> to vector<1x256xf32>
    %167 = vector.broadcast %166 : vector<1x256xf32> to vector<8x256xf32>
    %168 = arith.mulf %165, %167 : vector<8x256xf32>
    %c16_i32_47 = arith.constant 16 : i32
    %169 = tpu.dynamic_rotate %164 by %c16_i32_47 dim 1 : vector<8x256xf32>, i32 -> vector<8x256xf32>
    %170 = vector.extract_strided_slice %2 {offsets = [1, 0], sizes = [1, 256], strides = [1, 1]} : vector<9x256xf32> to vector<1x256xf32>
    %171 = vector.broadcast %170 : vector<1x256xf32> to vector<8x256xf32>
    %172 = arith.mulf %169, %171 : vector<8x256xf32>
    %c15_i32_48 = arith.constant 15 : i32
    %173 = tpu.dynamic_rotate %164 by %c15_i32_48 dim 1 : vector<8x256xf32>, i32 -> vector<8x256xf32>
    %174 = vector.extract_strided_slice %2 {offsets = [2, 0], sizes = [1, 256], strides = [1, 1]} : vector<9x256xf32> to vector<1x256xf32>
    %175 = vector.broadcast %174 : vector<1x256xf32> to vector<8x256xf32>
    %176 = arith.mulf %173, %175 : vector<8x256xf32>
    %c1_i32_49 = arith.constant 1 : i32
    %177 = tpu.dynamic_rotate %164 by %c1_i32_49 dim 1 : vector<8x256xf32>, i32 -> vector<8x256xf32>
    %178 = vector.extract_strided_slice %2 {offsets = [3, 0], sizes = [1, 256], strides = [1, 1]} : vector<9x256xf32> to vector<1x256xf32>
    %179 = vector.broadcast %178 : vector<1x256xf32> to vector<8x256xf32>
    %180 = arith.mulf %177, %179 : vector<8x256xf32>
    %c255_i32_50 = arith.constant 255 : i32
    %181 = tpu.dynamic_rotate %164 by %c255_i32_50 dim 1 : vector<8x256xf32>, i32 -> vector<8x256xf32>
    %182 = vector.extract_strided_slice %2 {offsets = [5, 0], sizes = [1, 256], strides = [1, 1]} : vector<9x256xf32> to vector<1x256xf32>
    %183 = vector.broadcast %182 : vector<1x256xf32> to vector<8x256xf32>
    %184 = arith.mulf %181, %183 : vector<8x256xf32>
    %c241_i32_51 = arith.constant 241 : i32
    %185 = tpu.dynamic_rotate %164 by %c241_i32_51 dim 1 : vector<8x256xf32>, i32 -> vector<8x256xf32>
    %186 = vector.extract_strided_slice %2 {offsets = [6, 0], sizes = [1, 256], strides = [1, 1]} : vector<9x256xf32> to vector<1x256xf32>
    %187 = vector.broadcast %186 : vector<1x256xf32> to vector<8x256xf32>
    %188 = arith.mulf %185, %187 : vector<8x256xf32>
    %c240_i32_52 = arith.constant 240 : i32
    %189 = tpu.dynamic_rotate %164 by %c240_i32_52 dim 1 : vector<8x256xf32>, i32 -> vector<8x256xf32>
    %190 = vector.extract_strided_slice %2 {offsets = [7, 0], sizes = [1, 256], strides = [1, 1]} : vector<9x256xf32> to vector<1x256xf32>
    %191 = vector.broadcast %190 : vector<1x256xf32> to vector<8x256xf32>
    %192 = arith.mulf %189, %191 : vector<8x256xf32>
    %c239_i32_53 = arith.constant 239 : i32
    %193 = tpu.dynamic_rotate %164 by %c239_i32_53 dim 1 : vector<8x256xf32>, i32 -> vector<8x256xf32>
    %194 = vector.extract_strided_slice %2 {offsets = [8, 0], sizes = [1, 256], strides = [1, 1]} : vector<9x256xf32> to vector<1x256xf32>
    %195 = vector.broadcast %194 : vector<1x256xf32> to vector<8x256xf32>
    %196 = arith.mulf %193, %195 : vector<8x256xf32>
    %197 = tpu.concatenate %168, %172, %176, %180, %164, %184, %188, %192, %196, %4 in 0 : vector<8x256xf32>, vector<8x256xf32>, vector<8x256xf32>, vector<8x256xf32>, vector<8x256xf32>, vector<8x256xf32>, vector<8x256xf32>, vector<8x256xf32>, vector<8x256xf32>, vector<1x256xf32> -> vector<73x256xf32>
    %198 = arith.truncf %197 : vector<73x256xf32> to vector<73x256xbf16>
    %c0_54 = arith.constant 0 : index
    %c0_55 = arith.constant 0 : index
    %199 = vector.load %arg6[%c0_54, %c0_55] : memref<1x73xbf16, #tpu.memory_space<vmem>>, vector<1x73xbf16>
    %cst_56 = arith.constant dense<0.000000e+00> : vector<1x256xf32>
    %200 = tpu.matmul %199, %198, %cst_56 {dimension_numbers = #tpu.dot_dimension_numbers<[1], [0], [0], [1], [0, 0, 1, 1], [], []>} : vector<1x73xbf16>, vector<73x256xbf16>, vector<1x256xf32> -> vector<1x256xf32>
    %201 = math.tanh %200 : vector<1x256xf32>
    %c0_57 = arith.constant 0 : index
    %c0_58 = arith.constant 0 : index
    %c0_59 = arith.constant 0 : index
    %202 = vector.load %arg11[%c0_57, %c0_58, %c0_59] : memref<1x1x256xf32, #tpu.memory_space<vmem>>, vector<1x1x256xf32>
    %203 = vector.shape_cast %202 : vector<1x1x256xf32> to vector<1x256xf32>
    %204 = vector.shape_cast %201 : vector<1x256xf32> to vector<1x1x256xf32>
    tpu.vector_store %arg11[%c0_57, %c0_58, %c0_59], %204 {strides = array<i32>} : memref<1x1x256xf32, #tpu.memory_space<vmem>>, vector<1x1x256xf32>,
    return
  }
  func.func @transform_0(%arg0: i32) -> (i32, i32, i32) {
    %c0_i32 = arith.constant 0 : i32
    %c0_i32_0 = arith.constant 0 : i32
    %c0_i32_1 = arith.constant 0 : i32
    return %arg0, %c0_i32, %c0_i32_0 : i32, i32, i32
  }
  func.func @transform_1(%arg0: i32) -> (i32, i32) {
    %c0_i32 = arith.constant 0 : i32
    %c0_i32_0 = arith.constant 0 : i32
    %c0_i32_1 = arith.constant 0 : i32
    return %c0_i32, %c0_i32_0 : i32, i32
  }
  func.func @transform_2(%arg0: i32) -> (i32, i32) {
    %c0_i32 = arith.constant 0 : i32
    %c0_i32_0 = arith.constant 0 : i32
    %c0_i32_1 = arith.constant 0 : i32
    return %c0_i32, %c0_i32_0 : i32, i32
  }
  func.func @transform_3(%arg0: i32) -> (i32, i32) {
    %c0_i32 = arith.constant 0 : i32
    %c0_i32_0 = arith.constant 0 : i32
    %c0_i32_1 = arith.constant 0 : i32
    return %c0_i32, %c0_i32_0 : i32, i32
  }
  func.func @transform_4(%arg0: i32) -> (i32, i32) {
    %c0_i32 = arith.constant 0 : i32
    %c0_i32_0 = arith.constant 0 : i32
    %c0_i32_1 = arith.constant 0 : i32
    return %c0_i32, %c0_i32_0 : i32, i32
  }
  func.func @transform_5(%arg0: i32) -> (i32, i32) {
    %c0_i32 = arith.constant 0 : i32
    %c0_i32_0 = arith.constant 0 : i32
    %c0_i32_1 = arith.constant 0 : i32
    return %c0_i32, %c0_i32_0 : i32, i32
  }
  func.func @transform_6(%arg0: i32) -> (i32, i32) {
    %c0_i32 = arith.constant 0 : i32
    %c0_i32_0 = arith.constant 0 : i32
    %c0_i32_1 = arith.constant 0 : i32
    return %c0_i32, %c0_i32_0 : i32, i32
  }
  func.func @transform_7(%arg0: i32) -> (i32, i32) {
    %c0_i32 = arith.constant 0 : i32
    %c0_i32_0 = arith.constant 0 : i32
    %c0_i32_1 = arith.constant 0 : i32
    return %c0_i32, %c0_i32_0 : i32, i32
  }
  func.func @transform_8(%arg0: i32) -> (i32, i32) {
    %c0_i32 = arith.constant 0 : i32
    %c0_i32_0 = arith.constant 0 : i32
    %c0_i32_1 = arith.constant 0 : i32
    return %c0_i32, %c0_i32_0 : i32, i32
  }
  func.func @transform_9(%arg0: i32) -> (i32, i32) {
    %c0_i32 = arith.constant 0 : i32
    %c0_i32_0 = arith.constant 0 : i32
    %c0_i32_1 = arith.constant 0 : i32
    return %c0_i32, %c0_i32_0 : i32, i32
  }
  func.func @transform_10(%arg0: i32) -> (i32, i32, i32) {
    %c0_i32 = arith.constant 0 : i32
    %c0_i32_0 = arith.constant 0 : i32
    %c0_i32_1 = arith.constant 0 : i32
    return %arg0, %c0_i32, %c0_i32_0 : i32, i32, i32
  }
}

</mosaic_0001>

<llo_original>
// kernel: encode_net_noise.1
$region0: #{encode_net_noise.1}
  #allocation0 [shape = 'u32[]', space=smem, size = 0x4, offset = 0x4, fixed_abs, tag = 'smem constant byte address 0x4 - core index']
  #allocation1 [shape = 'u32[144,128]{1,0:T(1,128)}', space=vmem, size = 0x12000, scoped, tag = 'internal scratch']
  %s0 = inlined_call_operand.vmem [shape: f32[2,4,256], index: 0, kind: input, shape index: {}]
  %s1 = inlined_call_operand.vmem [shape: bf16[8,37], index: 1, kind: input, shape index: {}]
  %s2 = inlined_call_operand.vmem [shape: bf16[16,73], index: 2, kind: input, shape index: {}]
  %s3 = inlined_call_operand.vmem [shape: bf16[16,145], index: 3, kind: input, shape index: {}]
  %s4 = inlined_call_operand.vmem [shape: bf16[8,145], index: 4, kind: input, shape index: {}]
  %s5 = inlined_call_operand.vmem [shape: bf16[1,73], index: 5, kind: input, shape index: {}]
  %s6 = inlined_call_operand.vmem [shape: f32[9,256], index: 6, kind: input, shape index: {}]
  %s7 = inlined_call_operand.vmem [shape: f32[9,64], index: 7, kind: input, shape index: {}]
  %s8 = inlined_call_operand.vmem [shape: bf16[256,64], index: 8, kind: input, shape index: {}]
  %s9 = inlined_call_operand.vmem [shape: bf16[64,256], index: 9, kind: input, shape index: {}]
  %s10 = inlined_call_operand.vmem [shape: f32[2,1,256], index: 10, kind: output, shape index: {}]
  %s11 = sld [smem:[#allocation0]]
  $region73: #{encode_net_noise.1} parent=0
    _
  %s13 = ssub.s32 1, %s11
  %s14 = scalar_select 0, %s13, %s11
  loop: start=0, step=1, limit=4
  $region2: #{encode_net_noise.1} parent=0 // loop_pre_header
    _
  $region3: #{encode_net_noise.1} parent=0 // loop_header
    %s16 = sphi 0, %s20
    %p17 = scmp.ge.s32.totalorder %s16, 4
    %s26 = sphi 0, %s28
    %s29 = sphi 0, %s26
    %s30 = sphi 0, %s29
    %s46 = sphi 0, %s30
    %s50 = sphi 0, %s50
    %s52 = sphi 0, %s50
    %s53 = sphi 0, %s52
    %s67 = sphi 0, %s53
    %s71 = sphi 0, %s71
    %s73 = sphi 0, %s71
    %s74 = sphi 0, %s73
    %s88 = sphi 0, %s74
    %s92 = sphi 0, %s92
    %s94 = sphi 0, %s92
    %s95 = sphi 0, %s94
    %s109 = sphi 0, %s95
    %s113 = sphi 0, %s113
    %s115 = sphi 0, %s113
    %s116 = sphi 0, %s115
    %s130 = sphi 0, %s116
    %s134 = sphi 0, %s134
    %s136 = sphi 0, %s134
    %s137 = sphi 0, %s136
    %s151 = sphi 0, %s137
    %s155 = sphi 0, %s155
    %s157 = sphi 0, %s155
    %s158 = sphi 0, %s157
    %s172 = sphi 0, %s158
    %s176 = sphi 0, %s176
    %s178 = sphi 0, %s176
    %s179 = sphi 0, %s178
    %s193 = sphi 0, %s179
    %s197 = sphi 0, %s197
    %s199 = sphi 0, %s197
    %s200 = sphi 0, %s199
    %s214 = sphi 0, %s200
    %s218 = sphi 0, %s218
    %s220 = sphi 0, %s218
    %s221 = sphi 0, %s220
    %s235 = sphi 0, %s221
    %s241 = sphi 0, %s243
    %s244 = sphi 0, %s241
    %s245 = sphi 0, %s244
    %s261 = sphi 0, %s245
  $region4: #{encode_net_noise.1} parent=0 // loop_header_branch
    %19 = sbr.rel (%p17) target = $region8
  $region5: #{encode_net_noise.1} parent=0 // loop_body
    %s21 = ssub.s32 %s16, 1
    %s22 = ssub.s32 %s16, 2
    %s23 = sadd.s32 %s16, 1
    %s24 = ssub.s32 %s16, %s23
    %p25 = scmp.eq.s32.totalorder %s24, 0
    %s27 = sadd.s32 %s26, 1
    %s28 = scalar_select %p25, %s26, %s27
    %p31 = pneg %p25
    %p32 = scmp.eq.s32.totalorder %s16, 1
    %p33 = por %p31, %p32
    %p34 = scmp.ne.s32.totalorder %s26, %s29
    %p35 = scmp.eq.s32.totalorder %s16, 0
    %p36 = por %p34, %p35
    %p37 = scmp.ne.s32.totalorder %s26, %s29
    %p38 = scmp.eq.s32.totalorder %s21, 1
    %p39 = por %p37, %p38
    %p40 = scmp.ne.s32.totalorder %s29, %s30
    %p41 = scmp.eq.s32.totalorder %s21, 0
    %p42 = por %p40, %p41
    %p43 = scmp.ne.s32.totalorder %s29, %s30
    %p44 = scmp.eq.s32.totalorder %s22, 1
    %p45 = por %p43, %p44
    %p47 = scmp.ne.s32.totalorder %s30, %s46
    %p48 = scmp.eq.s32.totalorder %s22, 0
    %p49 = por %p47, %p48
    %s51 = sadd.s32 %s50, 1
    %p54 = scmp.eq.s32.totalorder %s16, 1
    %p55 = scmp.ne.s32.totalorder %s50, %s52
    %p56 = scmp.eq.s32.totalorder %s16, 0
    %p57 = por %p55, %p56
    %p58 = scmp.ne.s32.totalorder %s50, %s52
    %p59 = scmp.eq.s32.totalorder %s21, 1
    %p60 = por %p58, %p59
    %p61 = scmp.ne.s32.totalorder %s52, %s53
    %p62 = scmp.eq.s32.totalorder %s21, 0
    %p63 = por %p61, %p62
    %p64 = scmp.ne.s32.totalorder %s52, %s53
    %p65 = scmp.eq.s32.totalorder %s22, 1
    %p66 = por %p64, %p65
    %p68 = scmp.ne.s32.totalorder %s53, %s67
    %p69 = scmp.eq.s32.totalorder %s22, 0
    %p70 = por %p68, %p69
    %s72 = sadd.s32 %s71, 1
    %p75 = scmp.eq.s32.totalorder %s16, 1
    %p76 = scmp.ne.s32.totalorder %s71, %s73
    %p77 = scmp.eq.s32.totalorder %s16, 0
    %p78 = por %p76, %p77
    %p79 = scmp.ne.s32.totalorder %s71, %s73
    %p80 = scmp.eq.s32.totalorder %s21, 1
    %p81 = por %p79, %p80
    %p82 = scmp.ne.s32.totalorder %s73, %s74
    %p83 = scmp.eq.s32.totalorder %s21, 0
    %p84 = por %p82, %p83
    %p85 = scmp.ne.s32.totalorder %s73, %s74
    %p86 = scmp.eq.s32.totalorder %s22, 1
    %p87 = por %p85, %p86
    %p89 = scmp.ne.s32.totalorder %s74, %s88
    %p90 = scmp.eq.s32.totalorder %s22, 0
    %p91 = por %p89, %p90
    %s93 = sadd.s32 %s92, 1
    %p96 = scmp.eq.s32.totalorder %s16, 1
    %p97 = scmp.ne.s32.totalorder %s92, %s94
    %p98 = scmp.eq.s32.totalorder %s16, 0
    %p99 = por %p97, %p98
    %p100 = scmp.ne.s32.totalorder %s92, %s94
    %p101 = scmp.eq.s32.totalorder %s21, 1
    %p102 = por %p100, %p101
    %p103 = scmp.ne.s32.totalorder %s94, %s95
    %p104 = scmp.eq.s32.totalorder %s21, 0
    %p105 = por %p103, %p104
    %p106 = scmp.ne.s32.totalorder %s94, %s95
    %p107 = scmp.eq.s32.totalorder %s22, 1
    %p108 = por %p106, %p107
    %p110 = scmp.ne.s32.totalorder %s95, %s109
    %p111 = scmp.eq.s32.totalorder %s22, 0
    %p112 = por %p110, %p111
    %s114 = sadd.s32 %s113, 1
    %p117 = scmp.eq.s32.totalorder %s16, 1
    %p118 = scmp.ne.s32.totalorder %s113, %s115
    %p119 = scmp.eq.s32.totalorder %s16, 0
    %p120 = por %p118, %p119
    %p121 = scmp.ne.s32.totalorder %s113, %s115
    %p122 = scmp.eq.s32.totalorder %s21, 1
    %p123 = por %p121, %p122
    %p124 = scmp.ne.s32.totalorder %s115, %s116
    %p125 = scmp.eq.s32.totalorder %s21, 0
    %p126 = por %p124, %p125
    %p127 = scmp.ne.s32.totalorder %s115, %s116
    %p128 = scmp.eq.s32.totalorder %s22, 1
    %p129 = por %p127, %p128
    %p131 = scmp.ne.s32.totalorder %s116, %s130
    %p132 = scmp.eq.s32.totalorder %s22, 0
    %p133 = por %p131, %p132
    %s135 = sadd.s32 %s134, 1
    %p138 = scmp.eq.s32.totalorder %s16, 1
    %p139 = scmp.ne.s32.totalorder %s134, %s136
    %p140 = scmp.eq.s32.totalorder %s16, 0
    %p141 = por %p139, %p140
    %p142 = scmp.ne.s32.totalorder %s134, %s136
    %p143 = scmp.eq.s32.totalorder %s21, 1
    %p144 = por %p142, %p143
    %p145 = scmp.ne.s32.totalorder %s136, %s137
    %p146 = scmp.eq.s32.totalorder %s21, 0
    %p147 = por %p145, %p146
    %p148 = scmp.ne.s32.totalorder %s136, %s137
    %p149 = scmp.eq.s32.totalorder %s22, 1
    %p150 = por %p148, %p149
    %p152 = scmp.ne.s32.totalorder %s137, %s151
    %p153 = scmp.eq.s32.totalorder %s22, 0
    %p154 = por %p152, %p153
    %s156 = sadd.s32 %s155, 1
    %p159 = scmp.eq.s32.totalorder %s16, 1
    %p160 = scmp.ne.s32.totalorder %s155, %s157
    %p161 = scmp.eq.s32.totalorder %s16, 0
    %p162 = por %p160, %p161
    %p163 = scmp.ne.s32.totalorder %s155, %s157
    %p164 = scmp.eq.s32.totalorder %s21, 1
    %p165 = por %p163, %p164
    %p166 = scmp.ne.s32.totalorder %s157, %s158
    %p167 = scmp.eq.s32.totalorder %s21, 0
    %p168 = por %p166, %p167
    %p169 = scmp.ne.s32.totalorder %s157, %s158
    %p170 = scmp.eq.s32.totalorder %s22, 1
    %p171 = por %p169, %p170
    %p173 = scmp.ne.s32.totalorder %s158, %s172
    %p174 = scmp.eq.s32.totalorder %s22, 0
    %p175 = por %p173, %p174
    %s177 = sadd.s32 %s176, 1
    %p180 = scmp.eq.s32.totalorder %s16, 1
    %p181 = scmp.ne.s32.totalorder %s176, %s178
    %p182 = scmp.eq.s32.totalorder %s16, 0
    %p183 = por %p181, %p182
    %p184 = scmp.ne.s32.totalorder %s176, %s178
    %p185 = scmp.eq.s32.totalorder %s21, 1
    %p186 = por %p184, %p185
    %p187 = scmp.ne.s32.totalorder %s178, %s179
    %p188 = scmp.eq.s32.totalorder %s21, 0
    %p189 = por %p187, %p188
    %p190 = scmp.ne.s32.totalorder %s178, %s179
    %p191 = scmp.eq.s32.totalorder %s22, 1
    %p192 = por %p190, %p191
    %p194 = scmp.ne.s32.totalorder %s179, %s193
    %p195 = scmp.eq.s32.totalorder %s22, 0
    %p196 = por %p194, %p195
    %s198 = sadd.s32 %s197, 1
    %p201 = scmp.eq.s32.totalorder %s16, 1
    %p202 = scmp.ne.s32.totalorder %s197, %s199
    %p203 = scmp.eq.s32.totalorder %s16, 0
    %p204 = por %p202, %p203
    %p205 = scmp.ne.s32.totalorder %s197, %s199
    %p206 = scmp.eq.s32.totalorder %s21, 1
    %p207 = por %p205, %p206
    %p208 = scmp.ne.s32.totalorder %s199, %s200
    %p209 = scmp.eq.s32.totalorder %s21, 0
    %p210 = por %p208, %p209
    %p211 = scmp.ne.s32.totalorder %s199, %s200
    %p212 = scmp.eq.s32.totalorder %s22, 1
    %p213 = por %p211, %p212
    %p215 = scmp.ne.s32.totalorder %s200, %s214
    %p216 = scmp.eq.s32.totalorder %s22, 0
    %p217 = por %p215, %p216
    %s219 = sadd.s32 %s218, 1
    %p222 = scmp.eq.s32.totalorder %s16, 1
    %p223 = scmp.ne.s32.totalorder %s218, %s220
    %p224 = scmp.eq.s32.totalorder %s16, 0
    %p225 = por %p223, %p224
    %p226 = scmp.ne.s32.totalorder %s218, %s220
    %p227 = scmp.eq.s32.totalorder %s21, 1
    %p228 = por %p226, %p227
    %p229 = scmp.ne.s32.totalorder %s220, %s221
    %p230 = scmp.eq.s32.totalorder %s21, 0
    %p231 = por %p229, %p230
    %p232 = scmp.ne.s32.totalorder %s220, %s221
    %p233 = scmp.eq.s32.totalorder %s22, 1
    %p234 = por %p232, %p233
    %p236 = scmp.ne.s32.totalorder %s221, %s235
    %p237 = scmp.eq.s32.totalorder %s22, 0
    %p238 = por %p236, %p237
    %s239 = ssub.s32 %s16, %s23
    %p240 = scmp.eq.s32.totalorder %s239, 0
    %s242 = sadd.s32 %s241, 1
    %s243 = scalar_select %p240, %s241, %s242
    %p246 = pneg %p240
    %p247 = scmp.eq.s32.totalorder %s16, 1
    %p248 = por %p246, %p247
    %p249 = scmp.ne.s32.totalorder %s241, %s244
    %p250 = scmp.eq.s32.totalorder %s16, 0
    %p251 = por %p249, %p250
    %p252 = scmp.ne.s32.totalorder %s241, %s244
    %p253 = scmp.eq.s32.totalorder %s21, 1
    %p254 = por %p252, %p253
    %p255 = scmp.ne.s32.totalorder %s244, %s245
    %p256 = scmp.eq.s32.totalorder %s21, 0
    %p257 = por %p255, %p256
    %p258 = scmp.ne.s32.totalorder %s244, %s245
    %p259 = scmp.eq.s32.totalorder %s22, 1
    %p260 = por %p258, %p259
    %p262 = scmp.ne.s32.totalorder %s245, %s261
    %p263 = scmp.eq.s32.totalorder %s22, 0
    %p264 = por %p262, %p263
    %p265 = scmp.le.s32.totalorder 1, %s16
    %p266 = scmp.lt.s32.totalorder %s16, 3
    %p267 = pnand %p265, %p266
    %p268 = pneg %p267
    // Predicated region
    $region9: #{encode_net_noise.1} parent=5 // pred_check
      _
    $region10: #{encode_net_noise.1} parent=5 // pred_check_branch
      %270 = sbr.rel (%p267) target = $region12
    $region11: #{encode_net_noise.1} parent=5 // pred_region
      %s271 = ssub.s32 %s16, 1
      // Predicated region
      $region13: #{encode_net_noise.1} parent=11 // pred_check
        %p272 = pneg %p63
      $region14: #{encode_net_noise.1} parent=11 // pred_check_branch
        %274 = sbr.rel (%p272) target = $region16
      $region15: #{encode_net_noise.1} parent=11 // pred_region
        _
      $region16: #{encode_net_noise.1} parent=11 // pred_fallthru
        _
      // Predicated region
      $region17: #{encode_net_noise.1} parent=11 // pred_check
        %p275 = pneg %p84
      $region18: #{encode_net_noise.1} parent=11 // pred_check_branch
        %277 = sbr.rel (%p275) target = $region20
      $region19: #{encode_net_noise.1} parent=11 // pred_region
        _
      $region20: #{encode_net_noise.1} parent=11 // pred_fallthru
        _
      // Predicated region
      $region21: #{encode_net_noise.1} parent=11 // pred_check
        %p278 = pneg %p105
      $region22: #{encode_net_noise.1} parent=11 // pred_check_branch
        %280 = sbr.rel (%p278) target = $region24
      $region23: #{encode_net_noise.1} parent=11 // pred_region
        _
      $region24: #{encode_net_noise.1} parent=11 // pred_fallthru
        _
      // Predicated region
      $region25: #{encode_net_noise.1} parent=11 // pred_check
        %p281 = pneg %p126
      $region26: #{encode_net_noise.1} parent=11 // pred_check_branch
        %283 = sbr.rel (%p281) target = $region28
      $region27: #{encode_net_noise.1} parent=11 // pred_region
        _
      $region28: #{encode_net_noise.1} parent=11 // pred_fallthru
        _
      // Predicated region
      $region29: #{encode_net_noise.1} parent=11 // pred_check
        %p284 = pneg %p147
      $region30: #{encode_net_noise.1} parent=11 // pred_check_branch
        %286 = sbr.rel (%p284) target = $region32
      $region31: #{encode_net_noise.1} parent=11 // pred_region
        _
      $region32: #{encode_net_noise.1} parent=11 // pred_fallthru
        _
      // Predicated region
      $region33: #{encode_net_noise.1} parent=11 // pred_check
        %p287 = pneg %p168
      $region34: #{encode_net_noise.1} parent=11 // pred_check_branch
        %289 = sbr.rel (%p287) target = $region36
      $region35: #{encode_net_noise.1} parent=11 // pred_region
        _
      $region36: #{encode_net_noise.1} parent=11 // pred_fallthru
        _
      // Predicated region
      $region37: #{encode_net_noise.1} parent=11 // pred_check
        %p290 = pneg %p189
      $region38: #{encode_net_noise.1} parent=11 // pred_check_branch
        %292 = sbr.rel (%p290) target = $region40
      $region39: #{encode_net_noise.1} parent=11 // pred_region
        _
      $region40: #{encode_net_noise.1} parent=11 // pred_fallthru
        _
      // Predicated region
      $region41: #{encode_net_noise.1} parent=11 // pred_check
        %p293 = pneg %p210
      $region42: #{encode_net_noise.1} parent=11 // pred_check_branch
        %295 = sbr.rel (%p293) target = $region44
      $region43: #{encode_net_noise.1} parent=11 // pred_region
        _
      $region44: #{encode_net_noise.1} parent=11 // pred_fallthru
        _
      // Predicated region
      $region45: #{encode_net_noise.1} parent=11 // pred_check
        %p296 = pneg %p231
      $region46: #{encode_net_noise.1} parent=11 // pred_check_branch
        %298 = sbr.rel (%p296) target = $region48
      $region47: #{encode_net_noise.1} parent=11 // pred_region
        _
      $region48: #{encode_net_noise.1} parent=11 // pred_fallthru
        _
    $region12: #{encode_net_noise.1} parent=5 // pred_fallthru
      _
    %p299 = scmp.lt.s32.totalorder %s16, 2
    // Predicated region
    $region49: #{encode_net_noise.1} parent=5 // pred_check
      %p300 = pneg %p299
    $region50: #{encode_net_noise.1} parent=5 // pred_check_branch
      %302 = sbr.rel (%p300) target = $region52
    $region51: #{encode_net_noise.1} parent=5 // pred_region
      // Predicated region
      $region53: #{encode_net_noise.1} parent=51 // pred_check
        %p303 = pneg %p36
      $region54: #{encode_net_noise.1} parent=51 // pred_check_branch
        %305 = sbr.rel (%p303) target = $region56
      $region55: #{encode_net_noise.1} parent=51 // pred_region
        %p306 = scmp.lt.s32.totalorder %s16, 1
        %s307 = scalar_select %p306, %s16, 1
        %s308 = smul.addr %s307, 2
        %s309 = smul.addr %s308, 4
        %s310 = scalar_lea.vmem %s0, %s309
      $region56: #{encode_net_noise.1} parent=51 // pred_fallthru
        _
    $region52: #{encode_net_noise.1} parent=5 // pred_fallthru
      _
    %p311 = scmp.le.s32.totalorder 1, %s16
    %p312 = scmp.lt.s32.totalorder %s16, 3
    %p313 = pnand %p311, %p312
    %p314 = pneg %p313
    // Predicated region
    $region57: #{encode_net_noise.1} parent=5 // pred_check
      _
    $region58: #{encode_net_noise.1} parent=5 // pred_check_branch
      %316 = sbr.rel (%p313) target = $region60
    $region59: #{encode_net_noise.1} parent=5 // pred_region
      %s317 = ssub.s32 %s16, 1
      %p318 = scmp.lt.s32.totalorder %s21, 1
      %s319 = scalar_select %p318, %s21, 1
      %s320 = smul.addr %s319, 2
      %s321 = smul.addr %s320, 4
      %s322 = scalar_lea.vmem %s0, %s321
      %p323 = pneg %p42
      %p324 = pneg %p39
      %p325 = pneg %p63
      %p326 = pneg %p60
      %p327 = pneg %p84
      %p328 = pneg %p81
      %p329 = pneg %p105
      %p330 = pneg %p102
      %p331 = pneg %p126
      %p332 = pneg %p123
      %p333 = pneg %p147
      %p334 = pneg %p144
      %p335 = pneg %p168
      %p336 = pneg %p165
      %p337 = pneg %p189
      %p338 = pneg %p186
      %p339 = pneg %p210
      %p340 = pneg %p207
      %p341 = pneg %p231
      %p342 = pneg %p228
      %p343 = pneg %p257
      %p344 = pneg %p254
      %p345 = scmp.lt.s32.totalorder %s21, 1
      %s346 = scalar_select %p345, %s21, 1
      %s347 = smul.addr %s346, 2
      %s348 = scalar_lea.vmem %s10, %s347
      %p349 = scmp.lt.s32.totalorder %s21, 1
      %s350 = scalar_select %p349, %s21, 1
      %s351 = smul.addr %s350, 2
      %s352 = smul.addr %s351, 4
      %s353 = scalar_lea.vmem %s0, %s352
      %p354 = scmp.lt.s32.totalorder %s21, 1
      %s355 = scalar_select %p354, %s21, 1
      %s356 = smul.addr %s355, 2
      %s357 = scalar_lea.vmem %s10, %s356
      %v359 = vld [vmem:[%s353] sm:$0xff]
      %v360 = vld [vmem:[%s6] sm:$0xff]
      %v361 = vld [vmem:[%s6 + $0x8] sm:$0xff]
      %v362 = vld [vmem:[%s6 + $0x10] sm:$0x1]
      %v363 = vld [vmem:[%s6 + $0x18] sm:$0x1]
      %v364 = vld [vmem:[%s7] sm:$0xff]
      %v365 = vld [vmem:[%s7 + $0x8] sm:$0x1]
      %v367 = vcombine.high %v359, %v359
      %369 = vrot.lane.b32.xlu0 %v359, 17
      %v370 = vpop.permute.xlu0 %369
      %371 = vrot.lane.b32.xlu0 %v367, 17
      %v372 = vpop.permute.xlu0 %371
      %v373 = vlaneseq
      %v374 = vand.u32 %v373, 127
      %vm375 = vcmp.lt.s32.totalorder %v374, 17
      %v376 = vsel %vm375, %v370, %v372
      %v377 = vsel %vm375, %v372, %v370
      %v378 = vlaneseq
      %v379 = vshrl.u32 %v378, 7
      %v380 = vsub.s32 0, %v379
      %v381 = vrot.slane %v360, %v380
      %v382 = vlaneseq
      %v383 = vshrl.u32 %v382, 7
      %v384 = vsub.s32 0, %v383
      %v385 = vrot.slane %v361, %v384
      %v386 = vmul.f32 %v377, %v381
      %v387 = vmul.f32 %v376, %v385
      %388 = vrot.lane.b32.xlu0 %v359, 16
      %v389 = vpop.permute.xlu0 %388
      %390 = vrot.lane.b32.xlu0 %v367, 16
      %v391 = vpop.permute.xlu0 %390
      %vm392 = vcmp.lt.s32.totalorder %v374, 16
      %v393 = vsel %vm392, %v389, %v391
      %v394 = vsel %vm392, %v391, %v389
      %v395 = vlaneseq
      %v396 = vshrl.u32 %v395, 7
      %v397 = vsub.s32 1, %v396
      %v398 = vrot.slane %v360, %v397
      %v399 = vlaneseq
      %v400 = vshrl.u32 %v399, 7
      %v401 = vsub.s32 1, %v400
      %v402 = vrot.slane %v361, %v401
      %v403 = vmul.f32 %v394, %v398
      %v404 = vmul.f32 %v393, %v402
      %405 = vrot.lane.b32.xlu0 %v359, 15
      %v406 = vpop.permute.xlu0 %405
      %407 = vrot.lane.b32.xlu0 %v367, 15
      %v408 = vpop.permute.xlu0 %407
      %vm409 = vcmp.lt.s32.totalorder %v374, 15
      %v410 = vsel %vm409, %v406, %v408
      %v411 = vsel %vm409, %v408, %v406
      %v412 = vlaneseq
      %v413 = vshrl.u32 %v412, 7
      %v414 = vsub.s32 2, %v413
      %v415 = vrot.slane %v360, %v414
      %v416 = vlaneseq
      %v417 = vshrl.u32 %v416, 7
      %v418 = vsub.s32 2, %v417
      %v419 = vrot.slane %v361, %v418
      %v420 = vmul.f32 %v411, %v415
      %v421 = vmul.f32 %v410, %v419
      %422 = vrot.lane.b32.xlu0 %v359, 1
      %v423 = vpop.permute.xlu0 %422
      %424 = vrot.lane.b32.xlu0 %v367, 1
      %v425 = vpop.permute.xlu0 %424
      %vm426 = vcmp.lt.s32.totalorder %v374, 1
      %v427 = vsel %vm426, %v423, %v425
      %v428 = vsel %vm426, %v425, %v423
      %v429 = vlaneseq
      %v430 = vshrl.u32 %v429, 7
      %v431 = vsub.s32 3, %v430
      %v432 = vrot.slane %v360, %v431
      %v433 = vlaneseq
      %v434 = vshrl.u32 %v433, 7
      %v435 = vsub.s32 3, %v434
      %v436 = vrot.slane %v361, %v435
      %v437 = vmul.f32 %v428, %v432
      %v438 = vmul.f32 %v427, %v436
      %439 = vrot.lane.b32.xlu0 %v359, 127
      %v440 = vpop.permute.xlu0 %439
      %441 = vrot.lane.b32.xlu0 %v367, 127
      %v442 = vpop.permute.xlu0 %441
      %vm443 = vcmp.lt.s32.totalorder %v374, 127
      %v444 = vsel %vm443, %v440, %v442
      %v445 = vsel %vm443, %v442, %v440
      %v446 = vlaneseq
      %v447 = vshrl.u32 %v446, 7
      %v448 = vsub.s32 5, %v447
      %v449 = vrot.slane %v360, %v448
      %v450 = vlaneseq
      %v451 = vshrl.u32 %v450, 7
      %v452 = vsub.s32 5, %v451
      %v453 = vrot.slane %v361, %v452
      %v454 = vmul.f32 %v444, %v449
      %v455 = vmul.f32 %v445, %v453
      %456 = vrot.lane.b32.xlu0 %v359, 113
      %v457 = vpop.permute.xlu0 %456
      %458 = vrot.lane.b32.xlu0 %v367, 113
      %v459 = vpop.permute.xlu0 %458
      %vm460 = vcmp.lt.s32.totalorder %v374, 113
      %v461 = vsel %vm460, %v457, %v459
      %v462 = vsel %vm460, %v459, %v457
      %v463 = vlaneseq
      %v464 = vshrl.u32 %v463, 7
      %v465 = vsub.s32 6, %v464
      %v466 = vrot.slane %v360, %v465
      %v467 = vlaneseq
      %v468 = vshrl.u32 %v467, 7
      %v469 = vsub.s32 6, %v468
      %v470 = vrot.slane %v361, %v469
      %v471 = vmul.f32 %v461, %v466
      %v472 = vmul.f32 %v462, %v470
      %473 = vrot.lane.b32.xlu0 %v359, 112
      %v474 = vpop.permute.xlu0 %473
      %475 = vrot.lane.b32.xlu0 %v367, 112
      %v476 = vpop.permute.xlu0 %475
      %vm477 = vcmp.lt.s32.totalorder %v374, 112
      %v478 = vsel %vm477, %v474, %v476
      %v479 = vsel %vm477, %v476, %v474
      %v480 = vlaneseq
      %v481 = vshrl.u32 %v480, 7
      %v482 = vsub.s32 7, %v481
      %v483 = vrot.slane %v360, %v482
      %v484 = vlaneseq
      %v485 = vshrl.u32 %v484, 7
      %v486 = vsub.s32 7, %v485
      %v487 = vrot.slane %v361, %v486
      %v488 = vmul.f32 %v478, %v483
      %v489 = vmul.f32 %v479, %v487
      %490 = vrot.lane.b32.xlu0 %v359, 111
      %v491 = vpop.permute.xlu0 %490
      %492 = vrot.lane.b32.xlu0 %v367, 111
      %v493 = vpop.permute.xlu0 %492
      %vm494 = vcmp.lt.s32.totalorder %v374, 111
      %v495 = vsel %vm494, %v491, %v493
      %v496 = vsel %vm494, %v493, %v491
      %v497 = vlaneseq
      %v498 = vshrl.u32 %v497, 7
      %v499 = vsub.s32 0, %v498
      %v500 = vrot.slane %v362, %v499
      %v501 = vlaneseq
      %v502 = vshrl.u32 %v501, 7
      %v503 = vsub.s32 0, %v502
      %v504 = vrot.slane %v363, %v503
      %v505 = vmul.f32 %v495, %v500
      %v506 = vmul.f32 %v496, %v504
      %v509 = vrot.slane %v403, 4
      %v510 = vrot.slane %v404, 4
      %v515 = vrot.slane %v437, 4
      %v516 = vrot.slane %v438, 4
      %v521 = vrot.slane %v454, 4
      %v522 = vrot.slane %v455, 4
      %v527 = vrot.slane %v488, 4
      %v528 = vrot.slane %v489, 4
      %vm531 = vcmask 1043456
      %v532 = vsel %vm531, %v386, %v509
      %v533 = vsel %vm531, %v387, %v510
      %v534 = vsel %vm531, %v420, %v515
      %v535 = vsel %vm531, %v421, %v516
      %v536 = vsel %vm531, %v359, %v521
      %v537 = vsel %vm531, %v367, %v522
      %v538 = vsel %vm531, %v471, %v527
      %v539 = vsel %vm531, %v472, %v528
      %v540 = vsel %vm531, %v505, 1.0
      %v541 = vsel %vm531, %v506, 1.0
      %v542 = vpack.c.bf16 %v534, %v532
      %v543 = vpack.c.bf16 %v535, %v533
      %v544 = vpack.c.bf16 %v538, %v536
      %v545 = vpack.c.bf16 %v539, %v537
      %v546 = vpack.c.bf16 %v540, %v540
      %v547 = vpack.c.bf16 %v541, %v541
      %v548 = vld [vmem:[%s1] sm:$0xf]
      %vm549 = vcmask 302080
      %v551 = vsel %vm549, %v548, 0
      %vm553 = vcmask 1041408
      %vm554 = vcmask 1042432
      %v555 = vsel %vm553, 4294967295, 65535
      %v556 = vsel %vm554, %v555, 0
      %v558 = vand.u32 %v546, %v556
      %v561 = vand.u32 %v547, %v556
      %563 = vmatprep.subr.bf16.mxu0 %v543
      %564 = vmatpush1.bf16.msra.mxu0 %v542
      %565 = vmatprep.subr.bf16.mxu0 %v545
      %566 = vmatpush1.bf16.msra.mxu0 %v544
      %567 = vmatprep.subr.bf16.mxu0 %v561
      %568 = vmatpush1.bf16.msra.mxu0 %v558
      %569 = vmatprep.subr.bf16.mxu0 0
      %570 = vmatpush1.bf16.msra.mxu0 0
      %571 = vmatprep.subr.bf16.mxu0 0
      %572 = vmatpush1.bf16.msra.mxu0 0
      %573 = vmatprep.subr.bf16.mxu0 0
      %574 = vmatpush1.bf16.msra.mxu0 0
      %575 = vmatprep.subr.bf16.mxu0 0
      %576 = vmatpush1.bf16.msra.mxu0 0
      %577 = vmatprep.subr.bf16.mxu0 0
      %578 = vmatpush1.bf16.msra.mxu0 0
      %579 = vmatprep.subr.bf16.mxu0 0
      %580 = vmatpush1.bf16.msra.mxu0 0
      %581 = vmatprep.subr.bf16.mxu0 0
      %582 = vmatpush1.bf16.msra.mxu0 0
      %583 = vmatprep.subr.bf16.mxu0 0
      %584 = vmatpush1.bf16.msra.mxu0 0
      %585 = vmatprep.subr.bf16.mxu0 0
      %586 = vmatpush1.bf16.msra.mxu0 0
      %587 = vmatprep.subr.bf16.mxu0 0
      %588 = vmatpush1.bf16.msra.mxu0 0
      %589 = vmatprep.subr.bf16.mxu0 0
      %590 = vmatpush1.bf16.msra.mxu0 0
      %591 = vmatprep.subr.bf16.mxu0 0
      %592 = vmatpush1.bf16.msra.mxu0 0
      %593 = vmatprep.subr.bf16.mxu0 0
      %594 = vmatpush1.bf16.msra.mxu0 0
      %595 = vmatprep.mubr.bf16.mxu0 0
      %596 = vmatmul.mubr.bf16.gmra.mrb[0].mxu0 %v551
      %v597 = vpop.f32.mrb[0].mxu0
      %v598 = vadd.f32 0.0, %v597
      %v599 = vpop.f32.mrb[0].mxu0
      %v600 = vadd.f32 0.0, %v599
      %v601 = vpop.f32.mrb[0].mxu0
      %v602 = vpop.f32.mrb[0].mxu0
      %603 = vdwg.mxu0
      %v604 = vmax.f32 %v598, 0.0
      %v605 = vmax.f32 %v600, 0.0
      %606 = vrot.lane.b32.xlu0 %v604, 17
      %v607 = vpop.permute.xlu0 %606
      %608 = vrot.lane.b32.xlu0 %v605, 17
      %v609 = vpop.permute.xlu0 %608
      %v610 = vsel %vm375, %v607, %v609
      %v611 = vsel %vm375, %v609, %v607
      %v612 = vmul.f32 %v611, %v381
      %v613 = vmul.f32 %v610, %v385
      %614 = vrot.lane.b32.xlu0 %v604, 16
      %v615 = vpop.permute.xlu0 %614
      %616 = vrot.lane.b32.xlu0 %v605, 16
      %v617 = vpop.permute.xlu0 %616
      %v618 = vsel %vm392, %v615, %v617
      %v619 = vsel %vm392, %v617, %v615
      %v620 = vmul.f32 %v619, %v398
      %v621 = vmul.f32 %v618, %v402
      %622 = vrot.lane.b32.xlu0 %v604, 15
      %v623 = vpop.permute.xlu0 %622
      %624 = vrot.lane.b32.xlu0 %v605, 15
      %v625 = vpop.permute.xlu0 %624
      %v626 = vsel %vm409, %v623, %v625
      %v627 = vsel %vm409, %v625, %v623
      %v628 = vmul.f32 %v627, %v415
      %v629 = vmul.f32 %v626, %v419
      %630 = vrot.lane.b32.xlu0 %v604, 1
      %v631 = vpop.permute.xlu0 %630
      %632 = vrot.lane.b32.xlu0 %v605, 1
      %v633 = vpop.permute.xlu0 %632
      %v634 = vsel %vm426, %v631, %v633
      %v635 = vsel %vm426, %v633, %v631
      %v636 = vmul.f32 %v635, %v432
      %v637 = vmul.f32 %v634, %v436
      %638 = vrot.lane.b32.xlu0 %v604, 127
      %v639 = vpop.permute.xlu0 %638
      %640 = vrot.lane.b32.xlu0 %v605, 127
      %v641 = vpop.permute.xlu0 %640
      %v642 = vsel %vm443, %v639, %v641
      %v643 = vsel %vm443, %v641, %v639
      %v644 = vmul.f32 %v642, %v449
      %v645 = vmul.f32 %v643, %v453
      %646 = vrot.lane.b32.xlu0 %v604, 113
      %v647 = vpop.permute.xlu0 %646
      %648 = vrot.lane.b32.xlu0 %v605, 113
      %v649 = vpop.permute.xlu0 %648
      %v650 = vsel %vm460, %v647, %v649
      %v651 = vsel %vm460, %v649, %v647
      %v652 = vmul.f32 %v650, %v466
      %v653 = vmul.f32 %v651, %v470
      %654 = vrot.lane.b32.xlu0 %v604, 112
      %v655 = vpop.permute.xlu0 %654
      %656 = vrot.lane.b32.xlu0 %v605, 112
      %v657 = vpop.permute.xlu0 %656
      %v658 = vsel %vm477, %v655, %v657
      %v659 = vsel %vm477, %v657, %v655
      %v660 = vmul.f32 %v658, %v483
      %v661 = vmul.f32 %v659, %v487
      %662 = vrot.lane.b32.xlu0 %v604, 111
      %v663 = vpop.permute.xlu0 %662
      %664 = vrot.lane.b32.xlu0 %v605, 111
      %v665 = vpop.permute.xlu0 %664
      %v666 = vsel %vm494, %v663, %v665
      %v667 = vsel %vm494, %v665, %v663
      %v668 = vmul.f32 %v666, %v500
      %v669 = vmul.f32 %v667, %v504
      %v670 = vpack.c.bf16 %v620, %v612
      %v671 = vpack.c.bf16 %v621, %v613
      %v672 = vpack.c.bf16 %v636, %v628
      %v673 = vpack.c.bf16 %v637, %v629
      %v674 = vpack.c.bf16 %v644, %v604
      %v675 = vpack.c.bf16 %v645, %v605
      %v676 = vpack.c.bf16 %v660, %v652
      %v677 = vpack.c.bf16 %v661, %v653
      %v678 = vpack.c.bf16 1.0, %v668
      %v679 = vpack.c.bf16 1.0, %v669
      %v680 = vld [vmem:[%s2] sm:$0xf]
      %v681 = vld [vmem:[%s2 + $0x4] sm:$0xf]
      %v684 = vunpack.c.l.b16 %v680
      %v685 = vunpack.c.l.b16 %v681
      %v686 = vpack.c.b16 %v685, %v684
      %vm687 = vcmask 596992
      %v689 = vsel %vm687, %v686, 0
      %vm691 = vcmask 1044480
      %v692 = vsel %vm531, 4294967295, 65535
      %v693 = vsel %vm691, %v692, 0
      %v695 = vand.u32 %v678, %v693
      %v698 = vand.u32 %v679, %v693
      %700 = vmatprep.subr.bf16.mxu0 %v671
      %701 = vmatpush1.bf16.msra.mxu0 %v670
      %702 = vmatprep.subr.bf16.mxu0 %v673
      %703 = vmatpush1.bf16.msra.mxu0 %v672
      %704 = vmatprep.subr.bf16.mxu0 %v675
      %705 = vmatpush1.bf16.msra.mxu0 %v674
      %706 = vmatprep.subr.bf16.mxu0 %v677
      %707 = vmatpush1.bf16.msra.mxu0 %v676
      %708 = vmatprep.subr.bf16.mxu0 %v698
      %709 = vmatpush1.bf16.msra.mxu0 %v695
      %710 = vmatprep.subr.bf16.mxu0 0
      %711 = vmatpush1.bf16.msra.mxu0 0
      %712 = vmatprep.subr.bf16.mxu0 0
      %713 = vmatpush1.bf16.msra.mxu0 0
      %714 = vmatprep.subr.bf16.mxu0 0
      %715 = vmatpush1.bf16.msra.mxu0 0
      %716 = vmatprep.subr.bf16.mxu0 0
      %717 = vmatpush1.bf16.msra.mxu0 0
      %718 = vmatprep.subr.bf16.mxu0 0
      %719 = vmatpush1.bf16.msra.mxu0 0
      %720 = vmatprep.subr.bf16.mxu0 0
      %721 = vmatpush1.bf16.msra.mxu0 0
      %722 = vmatprep.subr.bf16.mxu0 0
      %723 = vmatpush1.bf16.msra.mxu0 0
      %724 = vmatprep.subr.bf16.mxu0 0
      %725 = vmatpush1.bf16.msra.mxu0 0
      %726 = vmatprep.subr.bf16.mxu0 0
      %727 = vmatpush1.bf16.msra.mxu0 0
      %728 = vmatprep.subr.bf16.mxu0 0
      %729 = vmatpush1.bf16.msra.mxu0 0
      %730 = vmatprep.subr.bf16.mxu0 0
      %731 = vmatpush1.bf16.msra.mxu0 0
      %732 = vmatprep.mubr.bf16.mxu0 0
      %733 = vmatmul.mubr.bf16.gmra.mrb[0].mxu0 %v689
      %v734 = vpop.f32.mrb[0].mxu0
      %v735 = vadd.f32 0.0, %v734
      %v736 = vpop.f32.mrb[0].mxu0
      %v737 = vadd.f32 0.0, %v736
      %v738 = vpop.f32.mrb[0].mxu0
      %v739 = vadd.f32 0.0, %v738
      %v740 = vpop.f32.mrb[0].mxu0
      %v741 = vadd.f32 0.0, %v740
      %742 = vdwg.mxu0
      %v743 = vmax.f32 %v735, 0.0
      %v744 = vmax.f32 %v737, 0.0
      %v745 = vmax.f32 %v739, 0.0
      %v746 = vmax.f32 %v741, 0.0
      %v747 = vpack.c.bf16 %v745, %v743
      %v748 = vpack.c.bf16 %v746, %v744
      %v749 = vld [vmem:[%s8] sm:$0xf]
      %v750 = vld [vmem:[%s8 + $0x4] sm:$0xf]
      %v751 = vld [vmem:[%s8 + $0x8] sm:$0xf]
      %v752 = vld [vmem:[%s8 + $0xc] sm:$0xf]
      %v753 = vld [vmem:[%s8 + $0x10] sm:$0xf]
      %v754 = vld [vmem:[%s8 + $0x14] sm:$0xf]
      %v755 = vld [vmem:[%s8 + $0x18] sm:$0xf]
      %v756 = vld [vmem:[%s8 + $0x1c] sm:$0xf]
      %v757 = vld [vmem:[%s8 + $0x20] sm:$0xf]
      %v758 = vld [vmem:[%s8 + $0x24] sm:$0xf]
      %v759 = vld [vmem:[%s8 + $0x28] sm:$0xf]
      %v760 = vld [vmem:[%s8 + $0x2c] sm:$0xf]
      %v761 = vld [vmem:[%s8 + $0x30] sm:$0xf]
      %v762 = vld [vmem:[%s8 + $0x34] sm:$0xf]
      %v763 = vld [vmem:[%s8 + $0x38] sm:$0xf]
      %v764 = vld [vmem:[%s8 + $0x3c] sm:$0xf]
      %v765 = vld [vmem:[%s8 + $0x40] sm:$0xf]
      %v766 = vld [vmem:[%s8 + $0x44] sm:$0xf]
      %v767 = vld [vmem:[%s8 + $0x48] sm:$0xf]
      %v768 = vld [vmem:[%s8 + $0x4c] sm:$0xf]
      %v769 = vld [vmem:[%s8 + $0x50] sm:$0xf]
      %v770 = vld [vmem:[%s8 + $0x54] sm:$0xf]
      %v771 = vld [vmem:[%s8 + $0x58] sm:$0xf]
      %v772 = vld [vmem:[%s8 + $0x5c] sm:$0xf]
      %v773 = vld [vmem:[%s8 + $0x60] sm:$0xf]
      %v774 = vld [vmem:[%s8 + $0x64] sm:$0xf]
      %v775 = vld [vmem:[%s8 + $0x68] sm:$0xf]
      %v776 = vld [vmem:[%s8 + $0x6c] sm:$0xf]
      %v777 = vld [vmem:[%s8 + $0x70] sm:$0xf]
      %v778 = vld [vmem:[%s8 + $0x74] sm:$0xf]
      %v779 = vld [vmem:[%s8 + $0x78] sm:$0xf]
      %v780 = vld [vmem:[%s8 + $0x7c] sm:$0xf]
      %v813 = vunpack.c.l.b16 %v749
      %v814 = vunpack.c.l.b16 %v750
      %v815 = vunpack.c.l.b16 %v751
      %v816 = vunpack.c.l.b16 %v752
      %v817 = vunpack.c.l.b16 %v753
      %v818 = vunpack.c.l.b16 %v754
      %v819 = vunpack.c.l.b16 %v755
      %v820 = vunpack.c.l.b16 %v756
      %v821 = vunpack.c.l.b16 %v757
      %v822 = vunpack.c.l.b16 %v758
      %v823 = vunpack.c.l.b16 %v759
      %v824 = vunpack.c.l.b16 %v760
      %v825 = vunpack.c.l.b16 %v761
      %v826 = vunpack.c.l.b16 %v762
      %v827 = vunpack.c.l.b16 %v763
      %v828 = vunpack.c.l.b16 %v764
      %v829 = vunpack.c.l.b16 %v765
      %v830 = vunpack.c.l.b16 %v766
      %v831 = vunpack.c.l.b16 %v767
      %v832 = vunpack.c.l.b16 %v768
      %v833 = vunpack.c.l.b16 %v769
      %v834 = vunpack.c.l.b16 %v770
      %v835 = vunpack.c.l.b16 %v771
      %v836 = vunpack.c.l.b16 %v772
      %v837 = vunpack.c.l.b16 %v773
      %v838 = vunpack.c.l.b16 %v774
      %v839 = vunpack.c.l.b16 %v775
      %v840 = vunpack.c.l.b16 %v776
      %v841 = vunpack.c.l.b16 %v777
      %v842 = vunpack.c.l.b16 %v778
      %v843 = vunpack.c.l.b16 %v779
      %v844 = vunpack.c.l.b16 %v780
      %v845 = vpack.c.b16 %v814, %v813
      %v846 = vpack.c.b16 %v816, %v815
      %v847 = vpack.c.b16 %v818, %v817
      %v848 = vpack.c.b16 %v820, %v819
      %v849 = vpack.c.b16 %v822, %v821
      %v850 = vpack.c.b16 %v824, %v823
      %v851 = vpack.c.b16 %v826, %v825
      %v852 = vpack.c.b16 %v828, %v827
      %v853 = vpack.c.b16 %v830, %v829
      %v854 = vpack.c.b16 %v832, %v831
      %v855 = vpack.c.b16 %v834, %v833
      %v856 = vpack.c.b16 %v836, %v835
      %v857 = vpack.c.b16 %v838, %v837
      %v858 = vpack.c.b16 %v840, %v839
      %v859 = vpack.c.b16 %v842, %v841
      %v860 = vpack.c.b16 %v844, %v843
      %877 = vmatprep.subr.bf16.mxu0 0
      %878 = vmatpush1.bf16.msra.mxu0 %v845
      %879 = vmatprep.subr.bf16.mxu0 0
      %880 = vmatpush1.bf16.msra.mxu0 %v846
      %881 = vmatprep.subr.bf16.mxu0 0
      %882 = vmatpush1.bf16.msra.mxu0 %v847
      %883 = vmatprep.subr.bf16.mxu0 0
      %884 = vmatpush1.bf16.msra.mxu0 %v848
      %885 = vmatprep.subr.bf16.mxu0 0
      %886 = vmatpush1.bf16.msra.mxu0 %v849
      %887 = vmatprep.subr.bf16.mxu0 0
      %888 = vmatpush1.bf16.msra.mxu0 %v850
      %889 = vmatprep.subr.bf16.mxu0 0
      %890 = vmatpush1.bf16.msra.mxu0 %v851
      %891 = vmatprep.subr.bf16.mxu0 0
      %892 = vmatpush1.bf16.msra.mxu0 %v852
      %893 = vmatprep.subr.bf16.mxu0 0
      %894 = vmatpush1.bf16.msra.mxu0 %v853
      %895 = vmatprep.subr.bf16.mxu0 0
      %896 = vmatpush1.bf16.msra.mxu0 %v854
      %897 = vmatprep.subr.bf16.mxu0 0
      %898 = vmatpush1.bf16.msra.mxu0 %v855
      %899 = vmatprep.subr.bf16.mxu0 0
      %900 = vmatpush1.bf16.msra.mxu0 %v856
      %901 = vmatprep.subr.bf16.mxu0 0
      %902 = vmatpush1.bf16.msra.mxu0 %v857
      %903 = vmatprep.subr.bf16.mxu0 0
      %904 = vmatpush1.bf16.msra.mxu0 %v858
      %905 = vmatprep.subr.bf16.mxu0 0
      %906 = vmatpush1.bf16.msra.mxu0 %v859
      %907 = vmatprep.subr.bf16.mxu0 0
      %908 = vmatpush1.bf16.msra.mxu0 %v860
      %909 = vmatprep.mubr.bf16.mxu0 %v748
      %910 = vmatmul.mubr.bf16.gmra.mrb[0].mxu0 %v747
      %v911 = vpop.f32.mrb[0].mxu0
      %v912 = vadd.f32 0.0, %v911
      %v913 = vpop.f32.mrb[0].mxu0
      %v914 = vpop.f32.mrb[0].mxu0
      %v915 = vadd.f32 0.0, %v914
      %v916 = vpop.f32.mrb[0].mxu0
      %917 = vdwg.mxu0
      %vm918 = vcmask 1048064
      %919 = vrot.lane.b32.xlu0 %v912, 64
      %v920 = vpop.permute.xlu0 %919
      %v921 = vsel %vm918, %v920, %v912
      %922 = vrot.lane.b32.xlu0 %v915, 64
      %v923 = vpop.permute.xlu0 %922
      %v924 = vsel %vm918, %v923, %v915
      %925 = vrot.lane.b32.xlu0 %v921, 64
      %v926 = vpop.permute.xlu0 %925
      %927 = vrot.lane.b32.xlu0 %v924, 64
      %v928 = vpop.permute.xlu0 %927
      %v929 = vsel %vm918, %v926, %v912
      %v930 = vsel %vm918, %v928, %v915
      %v931 = vlaneseq
      %v932 = vshrl.u32 %v931, 7
      %v933 = vsub.s32 0, %v932
      %v934 = vrot.slane %v364, %v933
      %936 = vrot.lane.b32.xlu0 %v934, 55
      %v937 = vpop.permute.xlu0 %936
      %v939 = vmul.f32 %v929, %v937
      %v940 = vmul.f32 %v930, %v937
      %v941 = vlaneseq
      %v942 = vshrl.u32 %v941, 7
      %v943 = vsub.s32 1, %v942
      %v944 = vrot.slane %v364, %v943
      %946 = vrot.lane.b32.xlu0 %v944, 56
      %v947 = vpop.permute.xlu0 %946
      %v949 = vmul.f32 %v929, %v947
      %v950 = vmul.f32 %v930, %v947
      %v951 = vlaneseq
      %v952 = vshrl.u32 %v951, 7
      %v953 = vsub.s32 2, %v952
      %v954 = vrot.slane %v364, %v953
      %956 = vrot.lane.b32.xlu0 %v954, 57
      %v957 = vpop.permute.xlu0 %956
      %v959 = vmul.f32 %v929, %v957
      %v960 = vmul.f32 %v930, %v957
      %v961 = vlaneseq
      %v962 = vshrl.u32 %v961, 7
      %v963 = vsub.s32 3, %v962
      %v964 = vrot.slane %v364, %v963
      %966 = vrot.lane.b32.xlu0 %v964, 63
      %v967 = vpop.permute.xlu0 %966
      %v969 = vmul.f32 %v929, %v967
      %v970 = vmul.f32 %v930, %v967
      %v971 = vlaneseq
      %v972 = vshrl.u32 %v971, 7
      %v973 = vsub.s32 5, %v972
      %v974 = vrot.slane %v364, %v973
      %976 = vrot.lane.b32.xlu0 %v974, 1
      %v977 = vpop.permute.xlu0 %976
      %v979 = vmul.f32 %v929, %v977
      %v980 = vmul.f32 %v930, %v977
      %v981 = vlaneseq
      %v982 = vshrl.u32 %v981, 7
      %v983 = vsub.s32 6, %v982
      %v984 = vrot.slane %v364, %v983
      %986 = vrot.lane.b32.xlu0 %v984, 7
      %v987 = vpop.permute.xlu0 %986
      %v989 = vmul.f32 %v929, %v987
      %v990 = vmul.f32 %v930, %v987
      %v991 = vlaneseq
      %v992 = vshrl.u32 %v991, 7
      %v993 = vsub.s32 7, %v992
      %v994 = vrot.slane %v364, %v993
      %996 = vrot.lane.b32.xlu0 %v994, 8
      %v997 = vpop.permute.xlu0 %996
      %v999 = vmul.f32 %v929, %v997
      %v1000 = vmul.f32 %v930, %v997
      %v1001 = vlaneseq
      %v1002 = vshrl.u32 %v1001, 7
      %v1003 = vsub.s32 0, %v1002
      %v1004 = vrot.slane %v365, %v1003
      %1006 = vrot.lane.b32.xlu0 %v1004, 9
      %v1007 = vpop.permute.xlu0 %1006
      %v1009 = vmul.f32 %v929, %v1007
      %v1010 = vmul.f32 %v930, %v1007
      %1013 = vrot.lane.b32.xlu0 %v949, 127
      %v1014 = vpop.permute.xlu0 %1013
      %1015 = vrot.lane.b32.xlu0 %v950, 127
      %v1016 = vpop.permute.xlu0 %1015
      %1021 = vrot.lane.b32.xlu0 %v959, 126
      %v1022 = vpop.permute.xlu0 %1021
      %1023 = vrot.lane.b32.xlu0 %v960, 126
      %v1024 = vpop.permute.xlu0 %1023
      %1029 = vrot.lane.b32.xlu0 %v969, 120
      %v1030 = vpop.permute.xlu0 %1029
      %1031 = vrot.lane.b32.xlu0 %v970, 120
      %v1032 = vpop.permute.xlu0 %1031
      %1037 = vrot.lane.b32.xlu0 %v912, 55
      %v1038 = vpop.permute.xlu0 %1037
      %1039 = vrot.lane.b32.xlu0 %v915, 55
      %v1040 = vpop.permute.xlu0 %1039
      %1045 = vrot.lane.b32.xlu0 %v979, 54
      %v1046 = vpop.permute.xlu0 %1045
      %1047 = vrot.lane.b32.xlu0 %v980, 54
      %v1048 = vpop.permute.xlu0 %1047
      %1053 = vrot.lane.b32.xlu0 %v989, 48
      %v1054 = vpop.permute.xlu0 %1053
      %1055 = vrot.lane.b32.xlu0 %v990, 48
      %v1056 = vpop.permute.xlu0 %1055
      %1061 = vrot.lane.b32.xlu0 %v999, 47
      %v1062 = vpop.permute.xlu0 %1061
      %1063 = vrot.lane.b32.xlu0 %v1000, 47
      %v1064 = vpop.permute.xlu0 %1063
      %1069 = vrot.lane.b32.xlu0 %v1009, 46
      %v1070 = vpop.permute.xlu0 %1069
      %1071 = vrot.lane.b32.xlu0 %v1010, 46
      %v1072 = vpop.permute.xlu0 %1071
      %v1075 = vpack.c.bf16 %v940, %v939
      %v1076 = vpack.c.bf16 %v1016, %v1014
      %v1077 = vpack.c.bf16 %v1024, %v1022
      %v1078 = vpack.c.bf16 %v1032, %v1030
      %v1079 = vpack.c.bf16 %v1040, %v1038
      %v1080 = vpack.c.bf16 %v1048, %v1046
      %v1081 = vpack.c.bf16 %v1056, %v1054
      %v1082 = vpack.c.bf16 %v1064, %v1062
      %v1083 = vpack.c.bf16 %v1072, %v1070
      %v1084 = vpack.c.bf16 1.0, 1.0
      %v1085 = vld [vmem:[%s3] sm:$0xff]
      %v1086 = vld [vmem:[%s3 + $0x8] sm:$0xff]
      %v1089 = vunpack.c.l.b16 %v1085
      %v1090 = vunpack.c.h.b16 %v1085
      %v1091 = vunpack.c.l.b16 %v1086
      %v1092 = vunpack.c.h.b16 %v1086
      %v1093 = vpack.c.b16 %v1091, %v1089
      %v1094 = vpack.c.b16 %v1092, %v1090
      %1106 = vrot.lane.b32.xlu0 %v1075, 73
      %v1107 = vpop.permute.xlu0 %1106
      %1108 = vrot.lane.b32.xlu0 %v1076, 73
      %v1109 = vpop.permute.xlu0 %1108
      %1110 = vrot.lane.b32.xlu0 %v1077, 73
      %v1111 = vpop.permute.xlu0 %1110
      %1112 = vrot.lane.b32.xlu0 %v1078, 73
      %v1113 = vpop.permute.xlu0 %1112
      %1114 = vrot.lane.b32.xlu0 %v1079, 73
      %v1115 = vpop.permute.xlu0 %1114
      %1116 = vrot.lane.b32.xlu0 %v1080, 73
      %v1117 = vpop.permute.xlu0 %1116
      %1118 = vrot.lane.b32.xlu0 %v1081, 73
      %v1119 = vpop.permute.xlu0 %1118
      %1120 = vrot.lane.b32.xlu0 %v1082, 73
      %v1121 = vpop.permute.xlu0 %1120
      %1122 = vrot.lane.b32.xlu0 %v1083, 73
      %v1123 = vpop.permute.xlu0 %1122
      %1124 = vrot.lane.b32.xlu0 %v1084, 73
      %v1125 = vpop.permute.xlu0 %1124
      %vm1135 = vcmask 138240
      %v1137 = vsel %vm1135, %v1094, 0
      %vm1139 = vcmask 1040384
      %v1140 = vsel 0, 4294967295, 65535
      %v1141 = vsel %vm1139, %v1140, 0
      %v1143 = vand.u32 %v1125, %v1141
      %1145 = vmatprep.subr.bf16.mxu0 0
      %1146 = vmatpush1.bf16.msra.mxu0 %v1107
      %1147 = vmatprep.subr.bf16.mxu0 0
      %1148 = vmatpush1.bf16.msra.mxu0 %v1109
      %1149 = vmatprep.subr.bf16.mxu0 0
      %1150 = vmatpush1.bf16.msra.mxu0 %v1111
      %1151 = vmatprep.subr.bf16.mxu0 0
      %1152 = vmatpush1.bf16.msra.mxu0 %v1113
      %1153 = vmatprep.subr.bf16.mxu0 0
      %1154 = vmatpush1.bf16.msra.mxu0 %v1115
      %1155 = vmatprep.subr.bf16.mxu0 0
      %1156 = vmatpush1.bf16.msra.mxu0 %v1117
      %1157 = vmatprep.subr.bf16.mxu0 0
      %1158 = vmatpush1.bf16.msra.mxu0 %v1119
      %1159 = vmatprep.subr.bf16.mxu0 0
      %1160 = vmatpush1.bf16.msra.mxu0 %v1121
      %1161 = vmatprep.subr.bf16.mxu0 0
      %1162 = vmatpush1.bf16.msra.mxu0 %v1123
      %1163 = vmatprep.subr.bf16.mxu0 0
      %1164 = vmatpush1.bf16.msra.mxu0 %v1143
      %1165 = vmatprep.subr.bf16.mxu0 0
      %1166 = vmatpush1.bf16.msra.mxu0 0
      %1167 = vmatprep.subr.bf16.mxu0 0
      %1168 = vmatpush1.bf16.msra.mxu0 0
      %1169 = vmatprep.subr.bf16.mxu0 0
      %1170 = vmatpush1.bf16.msra.mxu0 0
      %1171 = vmatprep.subr.bf16.mxu0 0
      %1172 = vmatpush1.bf16.msra.mxu0 0
      %1173 = vmatprep.subr.bf16.mxu0 0
      %1174 = vmatpush1.bf16.msra.mxu0 0
      %1175 = vmatprep.subr.bf16.mxu0 0
      %1176 = vmatpush1.bf16.msra.mxu0 0
      %1177 = vmatprep.mubr.bf16.mxu0 %v1137
      %1178 = vmatmul.mubr.bf16.gmra.mrb[0].mxu0 %v1093
      %v1179 = vpop.f32.mrb[0].mxu0
      %v1180 = vadd.f32 0.0, %v1179
      %v1181 = vpop.f32.mrb[0].mxu0
      %v1182 = vpop.f32.mrb[0].mxu0
      %v1183 = vadd.f32 0.0, %v1182
      %v1184 = vpop.f32.mrb[0].mxu0
      %1185 = vdwg.mxu0
      %v1186 = vmax.f32 %v1180, 0.0
      %v1187 = vmax.f32 %v1183, 0.0
      %v1188 = vpack.c.bf16 %v1187, %v1186
      %v1189 = vld [vmem:[%s9] sm:$0xff]
      %v1190 = vld [vmem:[%s9 + $0x8] sm:$0xff]
      %v1191 = vld [vmem:[%s9 + $0x10] sm:$0xff]
      %v1192 = vld [vmem:[%s9 + $0x18] sm:$0xff]
      %v1193 = vld [vmem:[%s9 + $0x20] sm:$0xff]
      %v1194 = vld [vmem:[%s9 + $0x28] sm:$0xff]
      %v1195 = vld [vmem:[%s9 + $0x30] sm:$0xff]
      %v1196 = vld [vmem:[%s9 + $0x38] sm:$0xff]
      %v1205 = vunpack.c.l.b16 %v1189
      %v1206 = vunpack.c.h.b16 %v1189
      %v1207 = vunpack.c.l.b16 %v1190
      %v1208 = vunpack.c.h.b16 %v1190
      %v1209 = vunpack.c.l.b16 %v1191
      %v1210 = vunpack.c.h.b16 %v1191
      %v1211 = vunpack.c.l.b16 %v1192
      %v1212 = vunpack.c.h.b16 %v1192
      %v1213 = vunpack.c.l.b16 %v1193
      %v1214 = vunpack.c.h.b16 %v1193
      %v1215 = vunpack.c.l.b16 %v1194
      %v1216 = vunpack.c.h.b16 %v1194
      %v1217 = vunpack.c.l.b16 %v1195
      %v1218 = vunpack.c.h.b16 %v1195
      %v1219 = vunpack.c.l.b16 %v1196
      %v1220 = vunpack.c.h.b16 %v1196
      %v1221 = vpack.c.b16 %v1207, %v1205
      %v1222 = vpack.c.b16 %v1208, %v1206
      %v1223 = vpack.c.b16 %v1211, %v1209
      %v1224 = vpack.c.b16 %v1212, %v1210
      %v1225 = vpack.c.b16 %v1215, %v1213
      %v1226 = vpack.c.b16 %v1216, %v1214
      %v1227 = vpack.c.b16 %v1219, %v1217
      %v1228 = vpack.c.b16 %v1220, %v1218
      %vm1237 = vcmask 523264
      %v1239 = vsel %vm1237, %v1188, 0
      %1241 = vmatprep.subr.bf16.mxu0 %v1222
      %1242 = vmatpush1.bf16.msra.mxu0 %v1221
      %1243 = vmatprep.subr.bf16.mxu0 %v1224
      %1244 = vmatpush1.bf16.msra.mxu0 %v1223
      %1245 = vmatprep.subr.bf16.mxu0 %v1226
      %1246 = vmatpush1.bf16.msra.mxu0 %v1225
      %1247 = vmatprep.subr.bf16.mxu0 %v1228
      %1248 = vmatpush1.bf16.msra.mxu0 %v1227
      %1249 = vmatprep.subr.bf16.mxu0 0
      %1250 = vmatpush1.bf16.msra.mxu0 0
      %1251 = vmatprep.subr.bf16.mxu0 0
      %1252 = vmatpush1.bf16.msra.mxu0 0
      %1253 = vmatprep.subr.bf16.mxu0 0
      %1254 = vmatpush1.bf16.msra.mxu0 0
      %1255 = vmatprep.subr.bf16.mxu0 0
      %1256 = vmatpush1.bf16.msra.mxu0 0
      %1257 = vmatprep.subr.bf16.mxu0 0
      %1258 = vmatpush1.bf16.msra.mxu0 0
      %1259 = vmatprep.subr.bf16.mxu0 0
      %1260 = vmatpush1.bf16.msra.mxu0 0
      %1261 = vmatprep.subr.bf16.mxu0 0
      %1262 = vmatpush1.bf16.msra.mxu0 0
      %1263 = vmatprep.subr.bf16.mxu0 0
      %1264 = vmatpush1.bf16.msra.mxu0 0
      %1265 = vmatprep.subr.bf16.mxu0 0
      %1266 = vmatpush1.bf16.msra.mxu0 0
      %1267 = vmatprep.subr.bf16.mxu0 0
      %1268 = vmatpush1.bf16.msra.mxu0 0
      %1269 = vmatprep.subr.bf16.mxu0 0
      %1270 = vmatpush1.bf16.msra.mxu0 0
      %1271 = vmatprep.subr.bf16.mxu0 0
      %1272 = vmatpush1.bf16.msra.mxu0 0
      %1273 = vmatprep.mubr.bf16.mxu0 0
      %1274 = vmatmul.mubr.bf16.gmra.mrb[0].mxu0 %v1239
      %v1275 = vpop.f32.mrb[0].mxu0
      %v1276 = vadd.f32 0.0, %v1275
      %v1277 = vpop.f32.mrb[0].mxu0
      %v1278 = vadd.f32 0.0, %v1277
      %v1279 = vpop.f32.mrb[0].mxu0
      %v1280 = vadd.f32 0.0, %v1279
      %v1281 = vpop.f32.mrb[0].mxu0
      %v1282 = vadd.f32 0.0, %v1281
      %1283 = vdwg.mxu0
      %1284 = vrot.lane.b32.xlu0 %v1276, 17
      %v1285 = vpop.permute.xlu0 %1284
      %1286 = vrot.lane.b32.xlu0 %v1280, 17
      %v1287 = vpop.permute.xlu0 %1286
      %1288 = vrot.lane.b32.xlu0 %v1278, 17
      %v1289 = vpop.permute.xlu0 %1288
      %1290 = vrot.lane.b32.xlu0 %v1282, 17
      %v1291 = vpop.permute.xlu0 %1290
      %v1292 = vsel %vm375, %v1285, %v1289
      %v1293 = vsel %vm375, %v1287, %v1291
      %v1294 = vsel %vm375, %v1289, %v1285
      %v1295 = vsel %vm375, %v1291, %v1287
      %v1296 = vmul.f32 %v1294, %v381
      %v1297 = vmul.f32 %v1292, %v385
      %v1298 = vmul.f32 %v1295, %v381
      %v1299 = vmul.f32 %v1293, %v385
      %1300 = vrot.lane.b32.xlu0 %v1276, 16
      %v1301 = vpop.permute.xlu0 %1300
      %1302 = vrot.lane.b32.xlu0 %v1280, 16
      %v1303 = vpop.permute.xlu0 %1302
      %1304 = vrot.lane.b32.xlu0 %v1278, 16
      %v1305 = vpop.permute.xlu0 %1304
      %1306 = vrot.lane.b32.xlu0 %v1282, 16
      %v1307 = vpop.permute.xlu0 %1306
      %v1308 = vsel %vm392, %v1301, %v1305
      %v1309 = vsel %vm392, %v1303, %v1307
      %v1310 = vsel %vm392, %v1305, %v1301
      %v1311 = vsel %vm392, %v1307, %v1303
      %v1312 = vmul.f32 %v1310, %v398
      %v1313 = vmul.f32 %v1308, %v402
      %v1314 = vmul.f32 %v1311, %v398
      %v1315 = vmul.f32 %v1309, %v402
      %1316 = vrot.lane.b32.xlu0 %v1276, 15
      %v1317 = vpop.permute.xlu0 %1316
      %1318 = vrot.lane.b32.xlu0 %v1280, 15
      %v1319 = vpop.permute.xlu0 %1318
      %1320 = vrot.lane.b32.xlu0 %v1278, 15
      %v1321 = vpop.permute.xlu0 %1320
      %1322 = vrot.lane.b32.xlu0 %v1282, 15
      %v1323 = vpop.permute.xlu0 %1322
      %v1324 = vsel %vm409, %v1317, %v1321
      %v1325 = vsel %vm409, %v1319, %v1323
      %v1326 = vsel %vm409, %v1321, %v1317
      %v1327 = vsel %vm409, %v1323, %v1319
      %v1328 = vmul.f32 %v1326, %v415
      %v1329 = vmul.f32 %v1324, %v419
      %v1330 = vmul.f32 %v1327, %v415
      %v1331 = vmul.f32 %v1325, %v419
      %1332 = vrot.lane.b32.xlu0 %v1276, 1
      %v1333 = vpop.permute.xlu0 %1332
      %1334 = vrot.lane.b32.xlu0 %v1280, 1
      %v1335 = vpop.permute.xlu0 %1334
      %1336 = vrot.lane.b32.xlu0 %v1278, 1
      %v1337 = vpop.permute.xlu0 %1336
      %1338 = vrot.lane.b32.xlu0 %v1282, 1
      %v1339 = vpop.permute.xlu0 %1338
      %v1340 = vsel %vm426, %v1333, %v1337
      %v1341 = vsel %vm426, %v1335, %v1339
      %v1342 = vsel %vm426, %v1337, %v1333
      %v1343 = vsel %vm426, %v1339, %v1335
      %v1344 = vmul.f32 %v1342, %v432
      %v1345 = vmul.f32 %v1340, %v436
      %v1346 = vmul.f32 %v1343, %v432
      %v1347 = vmul.f32 %v1341, %v436
      %1348 = vrot.lane.b32.xlu0 %v1276, 127
      %v1349 = vpop.permute.xlu0 %1348
      %1350 = vrot.lane.b32.xlu0 %v1280, 127
      %v1351 = vpop.permute.xlu0 %1350
      %1352 = vrot.lane.b32.xlu0 %v1278, 127
      %v1353 = vpop.permute.xlu0 %1352
      %1354 = vrot.lane.b32.xlu0 %v1282, 127
      %v1355 = vpop.permute.xlu0 %1354
      %v1356 = vsel %vm443, %v1349, %v1353
      %v1357 = vsel %vm443, %v1351, %v1355
      %v1358 = vsel %vm443, %v1353, %v1349
      %v1359 = vsel %vm443, %v1355, %v1351
      %v1360 = vmul.f32 %v1356, %v449
      %v1361 = vmul.f32 %v1358, %v453
      %v1362 = vmul.f32 %v1357, %v449
      %v1363 = vmul.f32 %v1359, %v453
      %1364 = vrot.lane.b32.xlu0 %v1276, 113
      %v1365 = vpop.permute.xlu0 %1364
      %1366 = vrot.lane.b32.xlu0 %v1280, 113
      %v1367 = vpop.permute.xlu0 %1366
      %1368 = vrot.lane.b32.xlu0 %v1278, 113
      %v1369 = vpop.permute.xlu0 %1368
      %1370 = vrot.lane.b32.xlu0 %v1282, 113
      %v1371 = vpop.permute.xlu0 %1370
      %v1372 = vsel %vm460, %v1365, %v1369
      %v1373 = vsel %vm460, %v1367, %v1371
      %v1374 = vsel %vm460, %v1369, %v1365
      %v1375 = vsel %vm460, %v1371, %v1367
      %v1376 = vmul.f32 %v1372, %v466
      %v1377 = vmul.f32 %v1374, %v470
      %v1378 = vmul.f32 %v1373, %v466
      %v1379 = vmul.f32 %v1375, %v470
      %1380 = vrot.lane.b32.xlu0 %v1276, 112
      %v1381 = vpop.permute.xlu0 %1380
      %1382 = vrot.lane.b32.xlu0 %v1280, 112
      %v1383 = vpop.permute.xlu0 %1382
      %1384 = vrot.lane.b32.xlu0 %v1278, 112
      %v1385 = vpop.permute.xlu0 %1384
      %1386 = vrot.lane.b32.xlu0 %v1282, 112
      %v1387 = vpop.permute.xlu0 %1386
      %v1388 = vsel %vm477, %v1381, %v1385
      %v1389 = vsel %vm477, %v1383, %v1387
      %v1390 = vsel %vm477, %v1385, %v1381
      %v1391 = vsel %vm477, %v1387, %v1383
      %v1392 = vmul.f32 %v1388, %v483
      %v1393 = vmul.f32 %v1390, %v487
      %v1394 = vmul.f32 %v1389, %v483
      %v1395 = vmul.f32 %v1391, %v487
      %1396 = vrot.lane.b32.xlu0 %v1276, 111
      %v1397 = vpop.permute.xlu0 %1396
      %1398 = vrot.lane.b32.xlu0 %v1280, 111
      %v1399 = vpop.permute.xlu0 %1398
      %1400 = vrot.lane.b32.xlu0 %v1278, 111
      %v1401 = vpop.permute.xlu0 %1400
      %1402 = vrot.lane.b32.xlu0 %v1282, 111
      %v1403 = vpop.permute.xlu0 %1402
      %v1404 = vsel %vm494, %v1397, %v1401
      %v1405 = vsel %vm494, %v1399, %v1403
      %v1406 = vsel %vm494, %v1401, %v1397
      %v1407 = vsel %vm494, %v1403, %v1399
      %v1408 = vmul.f32 %v1404, %v500
      %v1409 = vmul.f32 %v1406, %v504
      %v1410 = vmul.f32 %v1405, %v500
      %v1411 = vmul.f32 %v1407, %v504
      %v1412 = vpack.c.bf16 %v1298, %v1296
      %v1413 = vpack.c.bf16 %v1299, %v1297
      %v1414 = vpack.c.bf16 %v1314, %v1312
      %v1415 = vpack.c.bf16 %v1315, %v1313
      %v1416 = vpack.c.bf16 %v1330, %v1328
      %v1417 = vpack.c.bf16 %v1331, %v1329
      %v1418 = vpack.c.bf16 %v1346, %v1344
      %v1419 = vpack.c.bf16 %v1347, %v1345
      %v1420 = vpack.c.bf16 %v1280, %v1276
      %v1421 = vpack.c.bf16 %v1282, %v1278
      %v1422 = vpack.c.bf16 %v1362, %v1360
      %v1423 = vpack.c.bf16 %v1363, %v1361
      %v1424 = vpack.c.bf16 %v1378, %v1376
      %v1425 = vpack.c.bf16 %v1379, %v1377
      %v1426 = vpack.c.bf16 %v1394, %v1392
      %v1427 = vpack.c.bf16 %v1395, %v1393
      %v1428 = vpack.c.bf16 %v1410, %v1408
      %v1429 = vpack.c.bf16 %v1411, %v1409
      %v1430 = vld [vmem:[%s4] sm:$0xff]
      %v1432 = vunpack.c.l.b16 %v1430
      %v1433 = vunpack.c.h.b16 %v1430
      %v1434 = vpack.c.b16 %v1432, %v1432
      %v1435 = vpack.c.b16 %v1433, %v1433
      %v1438 = vsel %vm1135, %v1435, 0
      %v1441 = vand.u32 %v1084, %v1141
      %1443 = vmatprep.subr.bf16.mxu0 %v1413
      %1444 = vmatpush1.bf16.msra.mxu0 %v1412
      %1445 = vmatprep.subr.bf16.mxu0 %v1415
      %1446 = vmatpush1.bf16.msra.mxu0 %v1414
      %1447 = vmatprep.subr.bf16.mxu0 %v1417
      %1448 = vmatpush1.bf16.msra.mxu0 %v1416
      %1449 = vmatprep.subr.bf16.mxu0 %v1419
      %1450 = vmatpush1.bf16.msra.mxu0 %v1418
      %1451 = vmatprep.subr.bf16.mxu0 %v1421
      %1452 = vmatpush1.bf16.msra.mxu0 %v1420
      %1453 = vmatprep.subr.bf16.mxu0 %v1423
      %1454 = vmatpush1.bf16.msra.mxu0 %v1422
      %1455 = vmatprep.subr.bf16.mxu0 %v1425
      %1456 = vmatpush1.bf16.msra.mxu0 %v1424
      %1457 = vmatprep.subr.bf16.mxu0 %v1427
      %1458 = vmatpush1.bf16.msra.mxu0 %v1426
      %1459 = vmatprep.subr.bf16.mxu0 %v1429
      %1460 = vmatpush1.bf16.msra.mxu0 %v1428
      %1461 = vmatprep.subr.bf16.mxu0 %v1441
      %1462 = vmatpush1.bf16.msra.mxu0 %v1441
      %1463 = vmatprep.subr.bf16.mxu0 0
      %1464 = vmatpush1.bf16.msra.mxu0 0
      %1465 = vmatprep.subr.bf16.mxu0 0
      %1466 = vmatpush1.bf16.msra.mxu0 0
      %1467 = vmatprep.subr.bf16.mxu0 0
      %1468 = vmatpush1.bf16.msra.mxu0 0
      %1469 = vmatprep.subr.bf16.mxu0 0
      %1470 = vmatpush1.bf16.msra.mxu0 0
      %1471 = vmatprep.subr.bf16.mxu0 0
      %1472 = vmatpush1.bf16.msra.mxu0 0
      %1473 = vmatprep.subr.bf16.mxu0 0
      %1474 = vmatpush1.bf16.msra.mxu0 0
      %1475 = vmatprep.mubr.bf16.mxu0 %v1438
      %1476 = vmatmul.mubr.bf16.gmra.mrb[0].mxu0 %v1434
      %v1477 = vpop.f32.mrb[0].mxu0
      %v1478 = vadd.f32 0.0, %v1477
      %v1479 = vpop.f32.mrb[0].mxu0
      %v1480 = vadd.f32 0.0, %v1479
      %v1481 = vpop.f32.mrb[0].mxu0
      %v1482 = vpop.f32.mrb[0].mxu0
      %1483 = vdwg.mxu0
      %v1484 = vmax.f32 %v1478, 0.0
      %v1485 = vmax.f32 %v1480, 0.0
      %v1486 = vadd.f32 %v604, %v1484
      %v1487 = vadd.f32 %v605, %v1485
      %1488 = vrot.lane.b32.xlu0 %v1486, 17
      %v1489 = vpop.permute.xlu0 %1488
      %1490 = vrot.lane.b32.xlu0 %v1487, 17
      %v1491 = vpop.permute.xlu0 %1490
      %v1492 = vsel %vm375, %v1489, %v1491
      %v1493 = vsel %vm375, %v1491, %v1489
      %v1494 = vmul.f32 %v1493, %v381
      %v1495 = vmul.f32 %v1492, %v385
      %1496 = vrot.lane.b32.xlu0 %v1486, 16
      %v1497 = vpop.permute.xlu0 %1496
      %1498 = vrot.lane.b32.xlu0 %v1487, 16
      %v1499 = vpop.permute.xlu0 %1498
      %v1500 = vsel %vm392, %v1497, %v1499
      %v1501 = vsel %vm392, %v1499, %v1497
      %v1502 = vmul.f32 %v1501, %v398
      %v1503 = vmul.f32 %v1500, %v402
      %1504 = vrot.lane.b32.xlu0 %v1486, 15
      %v1505 = vpop.permute.xlu0 %1504
      %1506 = vrot.lane.b32.xlu0 %v1487, 15
      %v1507 = vpop.permute.xlu0 %1506
      %v1508 = vsel %vm409, %v1505, %v1507
      %v1509 = vsel %vm409, %v1507, %v1505
      %v1510 = vmul.f32 %v1509, %v415
      %v1511 = vmul.f32 %v1508, %v419
      %1512 = vrot.lane.b32.xlu0 %v1486, 1
      %v1513 = vpop.permute.xlu0 %1512
      %1514 = vrot.lane.b32.xlu0 %v1487, 1
      %v1515 = vpop.permute.xlu0 %1514
      %v1516 = vsel %vm426, %v1513, %v1515
      %v1517 = vsel %vm426, %v1515, %v1513
      %v1518 = vmul.f32 %v1517, %v432
      %v1519 = vmul.f32 %v1516, %v436
      %1520 = vrot.lane.b32.xlu0 %v1486, 127
      %v1521 = vpop.permute.xlu0 %1520
      %1522 = vrot.lane.b32.xlu0 %v1487, 127
      %v1523 = vpop.permute.xlu0 %1522
      %v1524 = vsel %vm443, %v1521, %v1523
      %v1525 = vsel %vm443, %v1523, %v1521
      %v1526 = vmul.f32 %v1524, %v449
      %v1527 = vmul.f32 %v1525, %v453
      %1528 = vrot.lane.b32.xlu0 %v1486, 113
      %v1529 = vpop.permute.xlu0 %1528
      %1530 = vrot.lane.b32.xlu0 %v1487, 113
      %v1531 = vpop.permute.xlu0 %1530
      %v1532 = vsel %vm460, %v1529, %v1531
      %v1533 = vsel %vm460, %v1531, %v1529
      %v1534 = vmul.f32 %v1532, %v466
      %v1535 = vmul.f32 %v1533, %v470
      %1536 = vrot.lane.b32.xlu0 %v1486, 112
      %v1537 = vpop.permute.xlu0 %1536
      %1538 = vrot.lane.b32.xlu0 %v1487, 112
      %v1539 = vpop.permute.xlu0 %1538
      %v1540 = vsel %vm477, %v1537, %v1539
      %v1541 = vsel %vm477, %v1539, %v1537
      %v1542 = vmul.f32 %v1540, %v483
      %v1543 = vmul.f32 %v1541, %v487
      %1544 = vrot.lane.b32.xlu0 %v1486, 111
      %v1545 = vpop.permute.xlu0 %1544
      %1546 = vrot.lane.b32.xlu0 %v1487, 111
      %v1547 = vpop.permute.xlu0 %1546
      %v1548 = vsel %vm494, %v1545, %v1547
      %v1549 = vsel %vm494, %v1547, %v1545
      %v1550 = vmul.f32 %v1548, %v500
      %v1551 = vmul.f32 %v1549, %v504
      %v1552 = vpack.c.bf16 %v1502, %v1494
      %v1553 = vpack.c.bf16 %v1503, %v1495
      %v1554 = vpack.c.bf16 %v1518, %v1510
      %v1555 = vpack.c.bf16 %v1519, %v1511
      %v1556 = vpack.c.bf16 %v1526, %v1486
      %v1557 = vpack.c.bf16 %v1527, %v1487
      %v1558 = vpack.c.bf16 %v1542, %v1534
      %v1559 = vpack.c.bf16 %v1543, %v1535
      %v1560 = vpack.c.bf16 1.0, %v1550
      %v1561 = vpack.c.bf16 1.0, %v1551
      %v1562 = vld [vmem:[%s5] sm:$0x1]
      %v1564 = vsel %vm687, %v1562, 0
      %v1567 = vand.u32 %v1560, %v693
      %v1570 = vand.u32 %v1561, %v693
      %1572 = vmatprep.subr.bf16.mxu0 %v1553
      %1573 = vmatpush1.bf16.msra.mxu0 %v1552
      %1574 = vmatprep.subr.bf16.mxu0 %v1555
      %1575 = vmatpush1.bf16.msra.mxu0 %v1554
      %1576 = vmatprep.subr.bf16.mxu0 %v1557
      %1577 = vmatpush1.bf16.msra.mxu0 %v1556
      %1578 = vmatprep.subr.bf16.mxu0 %v1559
      %1579 = vmatpush1.bf16.msra.mxu0 %v1558
      %1580 = vmatprep.subr.bf16.mxu0 %v1570
      %1581 = vmatpush1.bf16.msra.mxu0 %v1567
      %1582 = vmatprep.subr.bf16.mxu0 0
      %1583 = vmatpush1.bf16.msra.mxu0 0
      %1584 = vmatprep.subr.bf16.mxu0 0
      %1585 = vmatpush1.bf16.msra.mxu0 0
      %1586 = vmatprep.subr.bf16.mxu0 0
      %1587 = vmatpush1.bf16.msra.mxu0 0
      %1588 = vmatprep.subr.bf16.mxu0 0
      %1589 = vmatpush1.bf16.msra.mxu0 0
      %1590 = vmatprep.subr.bf16.mxu0 0
      %1591 = vmatpush1.bf16.msra.mxu0 0
      %1592 = vmatprep.subr.bf16.mxu0 0
      %1593 = vmatpush1.bf16.msra.mxu0 0
      %1594 = vmatprep.subr.bf16.mxu0 0
      %1595 = vmatpush1.bf16.msra.mxu0 0
      %1596 = vmatprep.subr.bf16.mxu0 0
      %1597 = vmatpush1.bf16.msra.mxu0 0
      %1598 = vmatprep.subr.bf16.mxu0 0
      %1599 = vmatpush1.bf16.msra.mxu0 0
      %1600 = vmatprep.subr.bf16.mxu0 0
      %1601 = vmatpush1.bf16.msra.mxu0 0
      %1602 = vmatprep.subr.bf16.mxu0 0
      %1603 = vmatpush1.bf16.msra.mxu0 0
      %1604 = vmatprep.mubr.bf16.mxu0 0
      %1605 = vmatmul.mubr.bf16.gmra.mrb[0].mxu0 %v1564
      %v1606 = vpop.f32.mrb[0].mxu0
      %v1607 = vadd.f32 0.0, %v1606
      %v1608 = vpop.f32.mrb[0].mxu0
      %v1609 = vadd.f32 0.0, %v1608
      %v1610 = vpop.f32.mrb[0].mxu0
      %v1611 = vpop.f32.mrb[0].mxu0
      %1612 = vdwg.mxu0
      %v1613 = vtanh.pop %v1607
      %v1614 = vtanh.pop %v1609
      %v1617 = vcombine.low %v1613, %v1614
      %v1619 = vunpack.c.l.s4 1966171168
      %v1620 = vunpack.c.0.s8 %v1619
      %v1621 = vlaneseq
      %v1622 = vshrl.u32 %v1621, 7
      %v1623 = vsub.s32 %v1620, %v1622
      %v1624 = vrot.slane %v1617, %v1623
      %v1626 = vunpack.c.l.s4 1966171168
      %v1627 = vunpack.c.0.s8 %v1626
      %v1628 = vlaneseq
      %v1629 = vshrl.u32 %v1628, 7
      %v1630 = vsub.s32 %v1627, %v1629
      %v1631 = vrot.slane %v1624, %v1630
      %v1633 = vlaneseq
      %vm1634 = vcmp.ge.s32.totalorder %v1633, 0
      %vm1635 = vcmp.lt.s32.totalorder %v1633, 256
      %vm1636 = vmand %vm1634, %vm1635
      %1637 = vst.msk [vmem:[%s357] sm:$0x3] %vm1636, %v1631
      %p1638 = scmp.lt.s32.totalorder %s21, 1
      %s1639 = scalar_select %p1638, %s21, 1
      %s1640 = smul.addr %s1639, 2
      %s1641 = scalar_lea.vmem %s10, %s1640
      // Predicated region
      $region61: #{encode_net_noise.1} parent=59 // pred_check
        %p1642 = pneg %p254
      $region62: #{encode_net_noise.1} parent=59 // pred_check_branch
        %1644 = sbr.rel (%p1642) target = $region64
      $region63: #{encode_net_noise.1} parent=59 // pred_region
        _
      $region64: #{encode_net_noise.1} parent=59 // pred_fallthru
        _
    $region60: #{encode_net_noise.1} parent=5 // pred_fallthru
      _
    %p1645 = scmp.le.s32.totalorder 2, %s16
    // Predicated region
    $region65: #{encode_net_noise.1} parent=5 // pred_check
      %p1646 = pneg %p1645
    $region66: #{encode_net_noise.1} parent=5 // pred_check_branch
      %1648 = sbr.rel (%p1646) target = $region68
    $region67: #{encode_net_noise.1} parent=5 // pred_region
      %s1649 = ssub.s32 %s16, 2
      // Predicated region
      $region69: #{encode_net_noise.1} parent=67 // pred_check
        %p1650 = pneg %p260
      $region70: #{encode_net_noise.1} parent=67 // pred_check_branch
        %1652 = sbr.rel (%p1650) target = $region72
      $region71: #{encode_net_noise.1} parent=67 // pred_region
        %p1653 = scmp.lt.s32.totalorder %s22, 1
        %s1654 = scalar_select %p1653, %s22, 1
        %s1655 = smul.addr %s1654, 2
        %s1656 = scalar_lea.vmem %s10, %s1655
      $region72: #{encode_net_noise.1} parent=67 // pred_fallthru
        _
    $region68: #{encode_net_noise.1} parent=5 // pred_fallthru
      _
  $region6: #{encode_net_noise.1} parent=0 // loop_footer
    %s20 = sadd.s32 1, %s16
  $region7: #{encode_net_noise.1} parent=0 // loop_footer_branch
    %15 = sbr.rel target = $region3
  $region8: #{encode_net_noise.1} parent=0 // loop_exit
    _

</llo_original>
